<compile_context>
chip_gen: v7x
topology: tpu7x:2x2x1
jax: 0.10.0
libtpu: 0.0.40
codegen_flags: <defaults>
</compile_context>

<pallas_src>
import functools

import jax
import jax.numpy as jnp
from jax.experimental import pallas as pl
from jax.experimental.pallas import tpu as pltpu


def _sigmoid(z):
    # explicit form (exp + divide) to guarantee Mosaic lowering; exp runs on the EUP slot.
    return 1.0 / (1.0 + jnp.exp(-z))


# ------------------------------ fused kernel --------------------------------

def _lstm_fc_kernel(x_ref, wih_ref, whh_ref, b_ref, wfc_ref, bfc_ref, o_ref,
                    *, seq_len, hidden):
    """Runs the full LSTM recurrence over `seq_len` steps plus the final Linear.

    x_ref:   (S, N, I)    wih_ref: (I, 4H)   whh_ref: (H, 4H)   b_ref: (1, 4H)
    wfc_ref: (H, O)       bfc_ref: (1, O)    o_ref:   (N, O)
    """
    H = hidden
    batch = x_ref.shape[1]

    # hoist weight loads out of the time loop (tiny; each fits in a few vregs)
    wih = wih_ref[...]
    whh = whh_ref[...]
    b = b_ref[...]

    h = jnp.zeros((batch, H), jnp.float32)
    c = jnp.zeros((batch, H), jnp.float32)

    # seq_len is a compile-time constant and small; a static unrolled loop keeps the
    # whole recurrence in registers with full LLO scheduling visibility.
    for t in range(seq_len):
        x_t = x_ref[t]                                            # (N, I) load
        gates = (jnp.dot(x_t, wih, preferred_element_type=jnp.float32)
                 + jnp.dot(h, whh, preferred_element_type=jnp.float32)
                 + b)                                             # (N, 4H) lane-dense
        i_g = _sigmoid(gates[:, 0 * H:1 * H])
        f_g = _sigmoid(gates[:, 1 * H:2 * H])
        g_g = jnp.tanh(gates[:, 2 * H:3 * H])
        o_g = _sigmoid(gates[:, 3 * H:4 * H])
        c = f_g * c + i_g * g_g
        h = o_g * jnp.tanh(c)

    # final fc on the last hidden state only (matches fc(lstm_out[-1]))
    out = jnp.dot(h, wfc_ref[...], preferred_element_type=jnp.float32) + bfc_ref[...]
    o_ref[...] = out.astype(o_ref.dtype)


# ------------------------------ wrapper --------------------------------------

def simple_lstm_forward(params, x):
    """x: (S, N, input_size) -> (N, output_size)."""
    S, N, I = x.shape
    H = params["w_hh"].shape[0]
    O = params["w_fc"].shape[1]

    kernel = functools.partial(_lstm_fc_kernel, seq_len=S, hidden=H)
    return pl.pallas_call(
        kernel,
        out_shape=jax.ShapeDtypeStruct((N, O), x.dtype),
        grid=(1,),
        in_specs=[
            pl.BlockSpec((S, N, I), lambda i: (0, 0, 0)),
            pl.BlockSpec((I, 4 * H), lambda i: (0, 0)),
            pl.BlockSpec((H, 4 * H), lambda i: (0, 0)),
            pl.BlockSpec((1, 4 * H), lambda i: (0, 0)),
            pl.BlockSpec((H, O), lambda i: (0, 0)),
            pl.BlockSpec((1, O), lambda i: (0, 0)),
        ],
        out_specs=pl.BlockSpec((N, O), lambda i: (0, 0)),
        compiler_params=pltpu.CompilerParams(
            dimension_semantics=("arbitrary",)),
    )(x, params["w_ih"], params["w_hh"], params["b"],
      params["w_fc"], params["b_fc"])


# ------------------------------ params ---------------------------------------

def init_params(key, input_size, hidden_size, output_size):
    """Weights stored pre-transposed as (K, OUT); LSTM biases folded once at init."""
    ks = jax.random.split(key, 6)
    bound = 1.0 / (hidden_size ** 0.5)

    def u(k, shape):
        return jax.random.uniform(k, shape, jnp.float32, -bound, bound)

    w_ih = u(ks[0], (input_size, 4 * hidden_size))     # gate order i, f, g, o
    w_hh = u(ks[1], (hidden_size, 4 * hidden_size))
    b_ih = u(ks[2], (4 * hidden_size,))
    b_hh = u(ks[3], (4 * hidden_size,))
    w_fc = u(ks[4], (hidden_size, output_size))
    b_fc = u(ks[5], (output_size,))
    return dict(
        w_ih=w_ih,
        w_hh=w_hh,
        b=(b_ih + b_hh).reshape(1, 4 * hidden_size),
        w_fc=w_fc,
        b_fc=b_fc.reshape(1, output_size),
    )


# ------------------------------ pure-JAX reference ----------------------------

def _lstm_reference(params, x):
    S, N, I = x.shape
    H = params["w_hh"].shape[0]

    def step(carry, x_t):
        h, c = carry
        gates = x_t @ params["w_ih"] + h @ params["w_hh"] + params["b"]
        i = jax.nn.sigmoid(gates[:, 0 * H:1 * H])
        f = jax.nn.sigmoid(gates[:, 1 * H:2 * H])
        g = jnp.tanh(gates[:, 2 * H:3 * H])
        o = jax.nn.sigmoid(gates[:, 3 * H:4 * H])
        c = f * c + i * g
        h = o * jnp.tanh(c)
        return (h, c), None

    h0 = jnp.zeros((N, H), jnp.float32)
    c0 = jnp.zeros((N, H), jnp.float32)
    (h_last, _), _ = jax.lax.scan(step, (h0, c0), x)
    return h_last @ params["w_fc"] + params["b_fc"]


# ------------------------------ main ------------------------------------------

if __name__ == "__main__":
    input_size = 16
    hidden_size = 32        # 4H = 128 -> lane-dense gate matmul
    output_size = 8
    S, N = 8, 4             # seq_len, batch (sequence-first, like nn.LSTM default)

    key = jax.random.PRNGKey(0)
    kx, kp = jax.random.split(key)
    x = jax.random.normal(kx, (S, N, input_size), jnp.float32)
    params = init_params(kp, input_size, hidden_size, output_size)

    fwd = jax.jit(simple_lstm_forward)
    out = fwd(params, x)
    jax.block_until_ready(out)

    assert out.shape == (N, output_size), out.shape
    assert bool(jnp.all(jnp.isfinite(out)))

    ref = _lstm_reference(params, x)
    max_err = float(jnp.max(jnp.abs(out - ref)))
    assert jnp.allclose(out, ref, atol=1e-4, rtol=1e-4), max_err

    print("KERNEL_OK")
</pallas_src>

<mosaic_0001>
module attributes {stable_mosaic.version = 11 : i64} {
  func.func @_lstm_fc_kernel(%arg0: i32, %arg1: memref<8x4x16xf32, #tpu.memory_space<vmem>>, %arg2: memref<16x128xf32, #tpu.memory_space<vmem>>, %arg3: memref<32x128xf32, #tpu.memory_space<vmem>>, %arg4: memref<1x128xf32, #tpu.memory_space<vmem>>, %arg5: memref<32x8xf32, #tpu.memory_space<vmem>>, %arg6: memref<1x8xf32, #tpu.memory_space<vmem>>, %arg7: memref<4x8xf32, #tpu.memory_space<vmem>>) attributes {dimension_semantics = [#tpu.dimension_semantics<arbitrary>], iteration_bounds = array<i64: 1>, scalar_prefetch = 0 : i64, scratch_operands = 0 : i64, tpu.core_type = #tpu.core_type<tc>, window_params = [{pipeline_mode = #tpu.pipeline_mode<synchronous>, transform_indices = @transform_0, window_bounds = array<i64: 8, 4, 16>}, {pipeline_mode = #tpu.pipeline_mode<synchronous>, transform_indices = @transform_1, window_bounds = array<i64: 16, 128>}, {pipeline_mode = #tpu.pipeline_mode<synchronous>, transform_indices = @transform_2, window_bounds = array<i64: 32, 128>}, {pipeline_mode = #tpu.pipeline_mode<synchronous>, transform_indices = @transform_3, window_bounds = array<i64: 1, 128>}, {pipeline_mode = #tpu.pipeline_mode<synchronous>, transform_indices = @transform_4, window_bounds = array<i64: 32, 8>}, {pipeline_mode = #tpu.pipeline_mode<synchronous>, transform_indices = @transform_5, window_bounds = array<i64: 1, 8>}, {pipeline_mode = #tpu.pipeline_mode<synchronous>, transform_indices = @transform_6, window_bounds = array<i64: 4, 8>}]} {
    %c0 = arith.constant 0 : index
    %c0_0 = arith.constant 0 : index
    %0 = vector.load %arg2[%c0, %c0_0] : memref<16x128xf32, #tpu.memory_space<vmem>>, vector<16x128xf32>
    %c0_1 = arith.constant 0 : index
    %c0_2 = arith.constant 0 : index
    %1 = vector.load %arg3[%c0_1, %c0_2] : memref<32x128xf32, #tpu.memory_space<vmem>>, vector<32x128xf32>
    %c0_3 = arith.constant 0 : index
    %c0_4 = arith.constant 0 : index
    %2 = vector.load %arg4[%c0_3, %c0_4] : memref<1x128xf32, #tpu.memory_space<vmem>>, vector<1x128xf32>
    %cst = arith.constant 0.000000e+00 : f32
    %3 = vector.broadcast %cst : f32 to vector<4x32xf32>
    %cst_5 = arith.constant 0.000000e+00 : f32
    %4 = vector.broadcast %cst_5 : f32 to vector<4x32xf32>
    %c0_6 = arith.constant 0 : index
    %c0_7 = arith.constant 0 : index
    %c0_8 = arith.constant 0 : index
    %5 = vector.load %arg1[%c0_6, %c0_7, %c0_8] : memref<8x4x16xf32, #tpu.memory_space<vmem>>, vector<1x4x16xf32>
    %6 = vector.shape_cast %5 : vector<1x4x16xf32> to vector<4x16xf32>
    %cst_9 = arith.constant dense<0.000000e+00> : vector<4x128xf32>
    %7 = tpu.matmul %6, %0, %cst_9 {dimension_numbers = #tpu.dot_dimension_numbers<[1], [0], [0], [1], [0, 0, 1, 1], [], []>} : vector<4x16xf32>, vector<16x128xf32>, vector<4x128xf32> -> vector<4x128xf32>
    %cst_10 = arith.constant dense<0.000000e+00> : vector<4x128xf32>
    %8 = tpu.matmul %3, %1, %cst_10 {dimension_numbers = #tpu.dot_dimension_numbers<[1], [0], [0], [1], [0, 0, 1, 1], [], []>} : vector<4x32xf32>, vector<32x128xf32>, vector<4x128xf32> -> vector<4x128xf32>
    %9 = arith.addf %7, %8 : vector<4x128xf32>
    %10 = vector.broadcast %2 : vector<1x128xf32> to vector<4x128xf32>
    %11 = arith.addf %9, %10 : vector<4x128xf32>
    %12 = vector.extract_strided_slice %11 {offsets = [0, 0], sizes = [4, 32], strides = [1, 1]} : vector<4x128xf32> to vector<4x32xf32>
    %cst_11 = arith.constant 0.000000e+00 : f32
    %13 = vector.broadcast %cst_11 : f32 to vector<4x32xf32>
    %14 = arith.subf %13, %12 : vector<4x32xf32>
    %15 = math.exp %14 : vector<4x32xf32>
    %cst_12 = arith.constant 1.000000e+00 : f32
    %16 = vector.broadcast %cst_12 : f32 to vector<4x32xf32>
    %17 = arith.addf %16, %15 : vector<4x32xf32>
    %cst_13 = arith.constant 1.000000e+00 : f32
    %18 = vector.broadcast %cst_13 : f32 to vector<4x32xf32>
    %19 = arith.divf %18, %17 : vector<4x32xf32>
    %20 = vector.extract_strided_slice %11 {offsets = [0, 32], sizes = [4, 32], strides = [1, 1]} : vector<4x128xf32> to vector<4x32xf32>
    %cst_14 = arith.constant 0.000000e+00 : f32
    %21 = vector.broadcast %cst_14 : f32 to vector<4x32xf32>
    %22 = arith.subf %21, %20 : vector<4x32xf32>
    %23 = math.exp %22 : vector<4x32xf32>
    %cst_15 = arith.constant 1.000000e+00 : f32
    %24 = vector.broadcast %cst_15 : f32 to vector<4x32xf32>
    %25 = arith.addf %24, %23 : vector<4x32xf32>
    %cst_16 = arith.constant 1.000000e+00 : f32
    %26 = vector.broadcast %cst_16 : f32 to vector<4x32xf32>
    %27 = arith.divf %26, %25 : vector<4x32xf32>
    %28 = vector.extract_strided_slice %11 {offsets = [0, 64], sizes = [4, 32], strides = [1, 1]} : vector<4x128xf32> to vector<4x32xf32>
    %29 = math.tanh %28 : vector<4x32xf32>
    %30 = vector.extract_strided_slice %11 {offsets = [0, 96], sizes = [4, 32], strides = [1, 1]} : vector<4x128xf32> to vector<4x32xf32>
    %cst_17 = arith.constant 0.000000e+00 : f32
    %31 = vector.broadcast %cst_17 : f32 to vector<4x32xf32>
    %32 = arith.subf %31, %30 : vector<4x32xf32>
    %33 = math.exp %32 : vector<4x32xf32>
    %cst_18 = arith.constant 1.000000e+00 : f32
    %34 = vector.broadcast %cst_18 : f32 to vector<4x32xf32>
    %35 = arith.addf %34, %33 : vector<4x32xf32>
    %cst_19 = arith.constant 1.000000e+00 : f32
    %36 = vector.broadcast %cst_19 : f32 to vector<4x32xf32>
    %37 = arith.divf %36, %35 : vector<4x32xf32>
    %38 = arith.mulf %27, %4 : vector<4x32xf32>
    %39 = arith.mulf %19, %29 : vector<4x32xf32>
    %40 = arith.addf %38, %39 : vector<4x32xf32>
    %41 = math.tanh %40 : vector<4x32xf32>
    %42 = arith.mulf %37, %41 : vector<4x32xf32>
    %c1 = arith.constant 1 : index
    %c0_20 = arith.constant 0 : index
    %c0_21 = arith.constant 0 : index
    %43 = vector.load %arg1[%c1, %c0_20, %c0_21] : memref<8x4x16xf32, #tpu.memory_space<vmem>>, vector<1x4x16xf32>
    %44 = vector.shape_cast %43 : vector<1x4x16xf32> to vector<4x16xf32>
    %cst_22 = arith.constant dense<0.000000e+00> : vector<4x128xf32>
    %45 = tpu.matmul %44, %0, %cst_22 {dimension_numbers = #tpu.dot_dimension_numbers<[1], [0], [0], [1], [0, 0, 1, 1], [], []>} : vector<4x16xf32>, vector<16x128xf32>, vector<4x128xf32> -> vector<4x128xf32>
    %cst_23 = arith.constant dense<0.000000e+00> : vector<4x128xf32>
    %46 = tpu.matmul %42, %1, %cst_23 {dimension_numbers = #tpu.dot_dimension_numbers<[1], [0], [0], [1], [0, 0, 1, 1], [], []>} : vector<4x32xf32>, vector<32x128xf32>, vector<4x128xf32> -> vector<4x128xf32>
    %47 = arith.addf %45, %46 : vector<4x128xf32>
    %48 = vector.broadcast %2 : vector<1x128xf32> to vector<4x128xf32>
    %49 = arith.addf %47, %48 : vector<4x128xf32>
    %50 = vector.extract_strided_slice %49 {offsets = [0, 0], sizes = [4, 32], strides = [1, 1]} : vector<4x128xf32> to vector<4x32xf32>
    %cst_24 = arith.constant 0.000000e+00 : f32
    %51 = vector.broadcast %cst_24 : f32 to vector<4x32xf32>
    %52 = arith.subf %51, %50 : vector<4x32xf32>
    %53 = math.exp %52 : vector<4x32xf32>
    %cst_25 = arith.constant 1.000000e+00 : f32
    %54 = vector.broadcast %cst_25 : f32 to vector<4x32xf32>
    %55 = arith.addf %54, %53 : vector<4x32xf32>
    %cst_26 = arith.constant 1.000000e+00 : f32
    %56 = vector.broadcast %cst_26 : f32 to vector<4x32xf32>
    %57 = arith.divf %56, %55 : vector<4x32xf32>
    %58 = vector.extract_strided_slice %49 {offsets = [0, 32], sizes = [4, 32], strides = [1, 1]} : vector<4x128xf32> to vector<4x32xf32>
    %cst_27 = arith.constant 0.000000e+00 : f32
    %59 = vector.broadcast %cst_27 : f32 to vector<4x32xf32>
    %60 = arith.subf %59, %58 : vector<4x32xf32>
    %61 = math.exp %60 : vector<4x32xf32>
    %cst_28 = arith.constant 1.000000e+00 : f32
    %62 = vector.broadcast %cst_28 : f32 to vector<4x32xf32>
    %63 = arith.addf %62, %61 : vector<4x32xf32>
    %cst_29 = arith.constant 1.000000e+00 : f32
    %64 = vector.broadcast %cst_29 : f32 to vector<4x32xf32>
    %65 = arith.divf %64, %63 : vector<4x32xf32>
    %66 = vector.extract_strided_slice %49 {offsets = [0, 64], sizes = [4, 32], strides = [1, 1]} : vector<4x128xf32> to vector<4x32xf32>
    %67 = math.tanh %66 : vector<4x32xf32>
    %68 = vector.extract_strided_slice %49 {offsets = [0, 96], sizes = [4, 32], strides = [1, 1]} : vector<4x128xf32> to vector<4x32xf32>
    %cst_30 = arith.constant 0.000000e+00 : f32
    %69 = vector.broadcast %cst_30 : f32 to vector<4x32xf32>
    %70 = arith.subf %69, %68 : vector<4x32xf32>
    %71 = math.exp %70 : vector<4x32xf32>
    %cst_31 = arith.constant 1.000000e+00 : f32
    %72 = vector.broadcast %cst_31 : f32 to vector<4x32xf32>
    %73 = arith.addf %72, %71 : vector<4x32xf32>
    %cst_32 = arith.constant 1.000000e+00 : f32
    %74 = vector.broadcast %cst_32 : f32 to vector<4x32xf32>
    %75 = arith.divf %74, %73 : vector<4x32xf32>
    %76 = arith.mulf %65, %40 : vector<4x32xf32>
    %77 = arith.mulf %57, %67 : vector<4x32xf32>
    %78 = arith.addf %76, %77 : vector<4x32xf32>
    %79 = math.tanh %78 : vector<4x32xf32>
    %80 = arith.mulf %75, %79 : vector<4x32xf32>
    %c2 = arith.constant 2 : index
    %c0_33 = arith.constant 0 : index
    %c0_34 = arith.constant 0 : index
    %81 = vector.load %arg1[%c2, %c0_33, %c0_34] : memref<8x4x16xf32, #tpu.memory_space<vmem>>, vector<1x4x16xf32>
    %82 = vector.shape_cast %81 : vector<1x4x16xf32> to vector<4x16xf32>
    %cst_35 = arith.constant dense<0.000000e+00> : vector<4x128xf32>
    %83 = tpu.matmul %82, %0, %cst_35 {dimension_numbers = #tpu.dot_dimension_numbers<[1], [0], [0], [1], [0, 0, 1, 1], [], []>} : vector<4x16xf32>, vector<16x128xf32>, vector<4x128xf32> -> vector<4x128xf32>
    %cst_36 = arith.constant dense<0.000000e+00> : vector<4x128xf32>
    %84 = tpu.matmul %80, %1, %cst_36 {dimension_numbers = #tpu.dot_dimension_numbers<[1], [0], [0], [1], [0, 0, 1, 1], [], []>} : vector<4x32xf32>, vector<32x128xf32>, vector<4x128xf32> -> vector<4x128xf32>
    %85 = arith.addf %83, %84 : vector<4x128xf32>
    %86 = vector.broadcast %2 : vector<1x128xf32> to vector<4x128xf32>
    %87 = arith.addf %85, %86 : vector<4x128xf32>
    %88 = vector.extract_strided_slice %87 {offsets = [0, 0], sizes = [4, 32], strides = [1, 1]} : vector<4x128xf32> to vector<4x32xf32>
    %cst_37 = arith.constant 0.000000e+00 : f32
    %89 = vector.broadcast %cst_37 : f32 to vector<4x32xf32>
    %90 = arith.subf %89, %88 : vector<4x32xf32>
    %91 = math.exp %90 : vector<4x32xf32>
    %cst_38 = arith.constant 1.000000e+00 : f32
    %92 = vector.broadcast %cst_38 : f32 to vector<4x32xf32>
    %93 = arith.addf %92, %91 : vector<4x32xf32>
    %cst_39 = arith.constant 1.000000e+00 : f32
    %94 = vector.broadcast %cst_39 : f32 to vector<4x32xf32>
    %95 = arith.divf %94, %93 : vector<4x32xf32>
    %96 = vector.extract_strided_slice %87 {offsets = [0, 32], sizes = [4, 32], strides = [1, 1]} : vector<4x128xf32> to vector<4x32xf32>
    %cst_40 = arith.constant 0.000000e+00 : f32
    %97 = vector.broadcast %cst_40 : f32 to vector<4x32xf32>
    %98 = arith.subf %97, %96 : vector<4x32xf32>
    %99 = math.exp %98 : vector<4x32xf32>
    %cst_41 = arith.constant 1.000000e+00 : f32
    %100 = vector.broadcast %cst_41 : f32 to vector<4x32xf32>
    %101 = arith.addf %100, %99 : vector<4x32xf32>
    %cst_42 = arith.constant 1.000000e+00 : f32
    %102 = vector.broadcast %cst_42 : f32 to vector<4x32xf32>
    %103 = arith.divf %102, %101 : vector<4x32xf32>
    %104 = vector.extract_strided_slice %87 {offsets = [0, 64], sizes = [4, 32], strides = [1, 1]} : vector<4x128xf32> to vector<4x32xf32>
    %105 = math.tanh %104 : vector<4x32xf32>
    %106 = vector.extract_strided_slice %87 {offsets = [0, 96], sizes = [4, 32], strides = [1, 1]} : vector<4x128xf32> to vector<4x32xf32>
    %cst_43 = arith.constant 0.000000e+00 : f32
    %107 = vector.broadcast %cst_43 : f32 to vector<4x32xf32>
    %108 = arith.subf %107, %106 : vector<4x32xf32>
    %109 = math.exp %108 : vector<4x32xf32>
    %cst_44 = arith.constant 1.000000e+00 : f32
    %110 = vector.broadcast %cst_44 : f32 to vector<4x32xf32>
    %111 = arith.addf %110, %109 : vector<4x32xf32>
    %cst_45 = arith.constant 1.000000e+00 : f32
    %112 = vector.broadcast %cst_45 : f32 to vector<4x32xf32>
    %113 = arith.divf %112, %111 : vector<4x32xf32>
    %114 = arith.mulf %103, %78 : vector<4x32xf32>
    %115 = arith.mulf %95, %105 : vector<4x32xf32>
    %116 = arith.addf %114, %115 : vector<4x32xf32>
    %117 = math.tanh %116 : vector<4x32xf32>
    %118 = arith.mulf %113, %117 : vector<4x32xf32>
    %c3 = arith.constant 3 : index
    %c0_46 = arith.constant 0 : index
    %c0_47 = arith.constant 0 : index
    %119 = vector.load %arg1[%c3, %c0_46, %c0_47] : memref<8x4x16xf32, #tpu.memory_space<vmem>>, vector<1x4x16xf32>
    %120 = vector.shape_cast %119 : vector<1x4x16xf32> to vector<4x16xf32>
    %cst_48 = arith.constant dense<0.000000e+00> : vector<4x128xf32>
    %121 = tpu.matmul %120, %0, %cst_48 {dimension_numbers = #tpu.dot_dimension_numbers<[1], [0], [0], [1], [0, 0, 1, 1], [], []>} : vector<4x16xf32>, vector<16x128xf32>, vector<4x128xf32> -> vector<4x128xf32>
    %cst_49 = arith.constant dense<0.000000e+00> : vector<4x128xf32>
    %122 = tpu.matmul %118, %1, %cst_49 {dimension_numbers = #tpu.dot_dimension_numbers<[1], [0], [0], [1], [0, 0, 1, 1], [], []>} : vector<4x32xf32>, vector<32x128xf32>, vector<4x128xf32> -> vector<4x128xf32>
    %123 = arith.addf %121, %122 : vector<4x128xf32>
    %124 = vector.broadcast %2 : vector<1x128xf32> to vector<4x128xf32>
    %125 = arith.addf %123, %124 : vector<4x128xf32>
    %126 = vector.extract_strided_slice %125 {offsets = [0, 0], sizes = [4, 32], strides = [1, 1]} : vector<4x128xf32> to vector<4x32xf32>
    %cst_50 = arith.constant 0.000000e+00 : f32
    %127 = vector.broadcast %cst_50 : f32 to vector<4x32xf32>
    %128 = arith.subf %127, %126 : vector<4x32xf32>
    %129 = math.exp %128 : vector<4x32xf32>
    %cst_51 = arith.constant 1.000000e+00 : f32
    %130 = vector.broadcast %cst_51 : f32 to vector<4x32xf32>
    %131 = arith.addf %130, %129 : vector<4x32xf32>
    %cst_52 = arith.constant 1.000000e+00 : f32
    %132 = vector.broadcast %cst_52 : f32 to vector<4x32xf32>
    %133 = arith.divf %132, %131 : vector<4x32xf32>
    %134 = vector.extract_strided_slice %125 {offsets = [0, 32], sizes = [4, 32], strides = [1, 1]} : vector<4x128xf32> to vector<4x32xf32>
    %cst_53 = arith.constant 0.000000e+00 : f32
    %135 = vector.broadcast %cst_53 : f32 to vector<4x32xf32>
    %136 = arith.subf %135, %134 : vector<4x32xf32>
    %137 = math.exp %136 : vector<4x32xf32>
    %cst_54 = arith.constant 1.000000e+00 : f32
    %138 = vector.broadcast %cst_54 : f32 to vector<4x32xf32>
    %139 = arith.addf %138, %137 : vector<4x32xf32>
    %cst_55 = arith.constant 1.000000e+00 : f32
    %140 = vector.broadcast %cst_55 : f32 to vector<4x32xf32>
    %141 = arith.divf %140, %139 : vector<4x32xf32>
    %142 = vector.extract_strided_slice %125 {offsets = [0, 64], sizes = [4, 32], strides = [1, 1]} : vector<4x128xf32> to vector<4x32xf32>
    %143 = math.tanh %142 : vector<4x32xf32>
    %144 = vector.extract_strided_slice %125 {offsets = [0, 96], sizes = [4, 32], strides = [1, 1]} : vector<4x128xf32> to vector<4x32xf32>
    %cst_56 = arith.constant 0.000000e+00 : f32
    %145 = vector.broadcast %cst_56 : f32 to vector<4x32xf32>
    %146 = arith.subf %145, %144 : vector<4x32xf32>
    %147 = math.exp %146 : vector<4x32xf32>
    %cst_57 = arith.constant 1.000000e+00 : f32
    %148 = vector.broadcast %cst_57 : f32 to vector<4x32xf32>
    %149 = arith.addf %148, %147 : vector<4x32xf32>
    %cst_58 = arith.constant 1.000000e+00 : f32
    %150 = vector.broadcast %cst_58 : f32 to vector<4x32xf32>
    %151 = arith.divf %150, %149 : vector<4x32xf32>
    %152 = arith.mulf %141, %116 : vector<4x32xf32>
    %153 = arith.mulf %133, %143 : vector<4x32xf32>
    %154 = arith.addf %152, %153 : vector<4x32xf32>
    %155 = math.tanh %154 : vector<4x32xf32>
    %156 = arith.mulf %151, %155 : vector<4x32xf32>
    %c4 = arith.constant 4 : index
    %c0_59 = arith.constant 0 : index
    %c0_60 = arith.constant 0 : index
    %157 = vector.load %arg1[%c4, %c0_59, %c0_60] : memref<8x4x16xf32, #tpu.memory_space<vmem>>, vector<1x4x16xf32>
    %158 = vector.shape_cast %157 : vector<1x4x16xf32> to vector<4x16xf32>
    %cst_61 = arith.constant dense<0.000000e+00> : vector<4x128xf32>
    %159 = tpu.matmul %158, %0, %cst_61 {dimension_numbers = #tpu.dot_dimension_numbers<[1], [0], [0], [1], [0, 0, 1, 1], [], []>} : vector<4x16xf32>, vector<16x128xf32>, vector<4x128xf32> -> vector<4x128xf32>
    %cst_62 = arith.constant dense<0.000000e+00> : vector<4x128xf32>
    %160 = tpu.matmul %156, %1, %cst_62 {dimension_numbers = #tpu.dot_dimension_numbers<[1], [0], [0], [1], [0, 0, 1, 1], [], []>} : vector<4x32xf32>, vector<32x128xf32>, vector<4x128xf32> -> vector<4x128xf32>
    %161 = arith.addf %159, %160 : vector<4x128xf32>
    %162 = vector.broadcast %2 : vector<1x128xf32> to vector<4x128xf32>
    %163 = arith.addf %161, %162 : vector<4x128xf32>
    %164 = vector.extract_strided_slice %163 {offsets = [0, 0], sizes = [4, 32], strides = [1, 1]} : vector<4x128xf32> to vector<4x32xf32>
    %cst_63 = arith.constant 0.000000e+00 : f32
    %165 = vector.broadcast %cst_63 : f32 to vector<4x32xf32>
    %166 = arith.subf %165, %164 : vector<4x32xf32>
    %167 = math.exp %166 : vector<4x32xf32>
    %cst_64 = arith.constant 1.000000e+00 : f32
    %168 = vector.broadcast %cst_64 : f32 to vector<4x32xf32>
    %169 = arith.addf %168, %167 : vector<4x32xf32>
    %cst_65 = arith.constant 1.000000e+00 : f32
    %170 = vector.broadcast %cst_65 : f32 to vector<4x32xf32>
    %171 = arith.divf %170, %169 : vector<4x32xf32>
    %172 = vector.extract_strided_slice %163 {offsets = [0, 32], sizes = [4, 32], strides = [1, 1]} : vector<4x128xf32> to vector<4x32xf32>
    %cst_66 = arith.constant 0.000000e+00 : f32
    %173 = vector.broadcast %cst_66 : f32 to vector<4x32xf32>
    %174 = arith.subf %173, %172 : vector<4x32xf32>
    %175 = math.exp %174 : vector<4x32xf32>
    %cst_67 = arith.constant 1.000000e+00 : f32
    %176 = vector.broadcast %cst_67 : f32 to vector<4x32xf32>
    %177 = arith.addf %176, %175 : vector<4x32xf32>
    %cst_68 = arith.constant 1.000000e+00 : f32
    %178 = vector.broadcast %cst_68 : f32 to vector<4x32xf32>
    %179 = arith.divf %178, %177 : vector<4x32xf32>
    %180 = vector.extract_strided_slice %163 {offsets = [0, 64], sizes = [4, 32], strides = [1, 1]} : vector<4x128xf32> to vector<4x32xf32>
    %181 = math.tanh %180 : vector<4x32xf32>
    %182 = vector.extract_strided_slice %163 {offsets = [0, 96], sizes = [4, 32], strides = [1, 1]} : vector<4x128xf32> to vector<4x32xf32>
    %cst_69 = arith.constant 0.000000e+00 : f32
    %183 = vector.broadcast %cst_69 : f32 to vector<4x32xf32>
    %184 = arith.subf %183, %182 : vector<4x32xf32>
    %185 = math.exp %184 : vector<4x32xf32>
    %cst_70 = arith.constant 1.000000e+00 : f32
    %186 = vector.broadcast %cst_70 : f32 to vector<4x32xf32>
    %187 = arith.addf %186, %185 : vector<4x32xf32>
    %cst_71 = arith.constant 1.000000e+00 : f32
    %188 = vector.broadcast %cst_71 : f32 to vector<4x32xf32>
    %189 = arith.divf %188, %187 : vector<4x32xf32>
    %190 = arith.mulf %179, %154 : vector<4x32xf32>
    %191 = arith.mulf %171, %181 : vector<4x32xf32>
    %192 = arith.addf %190, %191 : vector<4x32xf32>
    %193 = math.tanh %192 : vector<4x32xf32>
    %194 = arith.mulf %189, %193 : vector<4x32xf32>
    %c5 = arith.constant 5 : index
    %c0_72 = arith.constant 0 : index
    %c0_73 = arith.constant 0 : index
    %195 = vector.load %arg1[%c5, %c0_72, %c0_73] : memref<8x4x16xf32, #tpu.memory_space<vmem>>, vector<1x4x16xf32>
    %196 = vector.shape_cast %195 : vector<1x4x16xf32> to vector<4x16xf32>
    %cst_74 = arith.constant dense<0.000000e+00> : vector<4x128xf32>
    %197 = tpu.matmul %196, %0, %cst_74 {dimension_numbers = #tpu.dot_dimension_numbers<[1], [0], [0], [1], [0, 0, 1, 1], [], []>} : vector<4x16xf32>, vector<16x128xf32>, vector<4x128xf32> -> vector<4x128xf32>
    %cst_75 = arith.constant dense<0.000000e+00> : vector<4x128xf32>
    %198 = tpu.matmul %194, %1, %cst_75 {dimension_numbers = #tpu.dot_dimension_numbers<[1], [0], [0], [1], [0, 0, 1, 1], [], []>} : vector<4x32xf32>, vector<32x128xf32>, vector<4x128xf32> -> vector<4x128xf32>
    %199 = arith.addf %197, %198 : vector<4x128xf32>
    %200 = vector.broadcast %2 : vector<1x128xf32> to vector<4x128xf32>
    %201 = arith.addf %199, %200 : vector<4x128xf32>
    %202 = vector.extract_strided_slice %201 {offsets = [0, 0], sizes = [4, 32], strides = [1, 1]} : vector<4x128xf32> to vector<4x32xf32>
    %cst_76 = arith.constant 0.000000e+00 : f32
    %203 = vector.broadcast %cst_76 : f32 to vector<4x32xf32>
    %204 = arith.subf %203, %202 : vector<4x32xf32>
    %205 = math.exp %204 : vector<4x32xf32>
    %cst_77 = arith.constant 1.000000e+00 : f32
    %206 = vector.broadcast %cst_77 : f32 to vector<4x32xf32>
    %207 = arith.addf %206, %205 : vector<4x32xf32>
    %cst_78 = arith.constant 1.000000e+00 : f32
    %208 = vector.broadcast %cst_78 : f32 to vector<4x32xf32>
    %209 = arith.divf %208, %207 : vector<4x32xf32>
    %210 = vector.extract_strided_slice %201 {offsets = [0, 32], sizes = [4, 32], strides = [1, 1]} : vector<4x128xf32> to vector<4x32xf32>
    %cst_79 = arith.constant 0.000000e+00 : f32
    %211 = vector.broadcast %cst_79 : f32 to vector<4x32xf32>
    %212 = arith.subf %211, %210 : vector<4x32xf32>
    %213 = math.exp %212 : vector<4x32xf32>
    %cst_80 = arith.constant 1.000000e+00 : f32
    %214 = vector.broadcast %cst_80 : f32 to vector<4x32xf32>
    %215 = arith.addf %214, %213 : vector<4x32xf32>
    %cst_81 = arith.constant 1.000000e+00 : f32
    %216 = vector.broadcast %cst_81 : f32 to vector<4x32xf32>
    %217 = arith.divf %216, %215 : vector<4x32xf32>
    %218 = vector.extract_strided_slice %201 {offsets = [0, 64], sizes = [4, 32], strides = [1, 1]} : vector<4x128xf32> to vector<4x32xf32>
    %219 = math.tanh %218 : vector<4x32xf32>
    %220 = vector.extract_strided_slice %201 {offsets = [0, 96], sizes = [4, 32], strides = [1, 1]} : vector<4x128xf32> to vector<4x32xf32>
    %cst_82 = arith.constant 0.000000e+00 : f32
    %221 = vector.broadcast %cst_82 : f32 to vector<4x32xf32>
    %222 = arith.subf %221, %220 : vector<4x32xf32>
    %223 = math.exp %222 : vector<4x32xf32>
    %cst_83 = arith.constant 1.000000e+00 : f32
    %224 = vector.broadcast %cst_83 : f32 to vector<4x32xf32>
    %225 = arith.addf %224, %223 : vector<4x32xf32>
    %cst_84 = arith.constant 1.000000e+00 : f32
    %226 = vector.broadcast %cst_84 : f32 to vector<4x32xf32>
    %227 = arith.divf %226, %225 : vector<4x32xf32>
    %228 = arith.mulf %217, %192 : vector<4x32xf32>
    %229 = arith.mulf %209, %219 : vector<4x32xf32>
    %230 = arith.addf %228, %229 : vector<4x32xf32>
    %231 = math.tanh %230 : vector<4x32xf32>
    %232 = arith.mulf %227, %231 : vector<4x32xf32>
    %c6 = arith.constant 6 : index
    %c0_85 = arith.constant 0 : index
    %c0_86 = arith.constant 0 : index
    %233 = vector.load %arg1[%c6, %c0_85, %c0_86] : memref<8x4x16xf32, #tpu.memory_space<vmem>>, vector<1x4x16xf32>
    %234 = vector.shape_cast %233 : vector<1x4x16xf32> to vector<4x16xf32>
    %cst_87 = arith.constant dense<0.000000e+00> : vector<4x128xf32>
    %235 = tpu.matmul %234, %0, %cst_87 {dimension_numbers = #tpu.dot_dimension_numbers<[1], [0], [0], [1], [0, 0, 1, 1], [], []>} : vector<4x16xf32>, vector<16x128xf32>, vector<4x128xf32> -> vector<4x128xf32>
    %cst_88 = arith.constant dense<0.000000e+00> : vector<4x128xf32>
    %236 = tpu.matmul %232, %1, %cst_88 {dimension_numbers = #tpu.dot_dimension_numbers<[1], [0], [0], [1], [0, 0, 1, 1], [], []>} : vector<4x32xf32>, vector<32x128xf32>, vector<4x128xf32> -> vector<4x128xf32>
    %237 = arith.addf %235, %236 : vector<4x128xf32>
    %238 = vector.broadcast %2 : vector<1x128xf32> to vector<4x128xf32>
    %239 = arith.addf %237, %238 : vector<4x128xf32>
    %240 = vector.extract_strided_slice %239 {offsets = [0, 0], sizes = [4, 32], strides = [1, 1]} : vector<4x128xf32> to vector<4x32xf32>
    %cst_89 = arith.constant 0.000000e+00 : f32
    %241 = vector.broadcast %cst_89 : f32 to vector<4x32xf32>
    %242 = arith.subf %241, %240 : vector<4x32xf32>
    %243 = math.exp %242 : vector<4x32xf32>
    %cst_90 = arith.constant 1.000000e+00 : f32
    %244 = vector.broadcast %cst_90 : f32 to vector<4x32xf32>
    %245 = arith.addf %244, %243 : vector<4x32xf32>
    %cst_91 = arith.constant 1.000000e+00 : f32
    %246 = vector.broadcast %cst_91 : f32 to vector<4x32xf32>
    %247 = arith.divf %246, %245 : vector<4x32xf32>
    %248 = vector.extract_strided_slice %239 {offsets = [0, 32], sizes = [4, 32], strides = [1, 1]} : vector<4x128xf32> to vector<4x32xf32>
    %cst_92 = arith.constant 0.000000e+00 : f32
    %249 = vector.broadcast %cst_92 : f32 to vector<4x32xf32>
    %250 = arith.subf %249, %248 : vector<4x32xf32>
    %251 = math.exp %250 : vector<4x32xf32>
    %cst_93 = arith.constant 1.000000e+00 : f32
    %252 = vector.broadcast %cst_93 : f32 to vector<4x32xf32>
    %253 = arith.addf %252, %251 : vector<4x32xf32>
    %cst_94 = arith.constant 1.000000e+00 : f32
    %254 = vector.broadcast %cst_94 : f32 to vector<4x32xf32>
    %255 = arith.divf %254, %253 : vector<4x32xf32>
    %256 = vector.extract_strided_slice %239 {offsets = [0, 64], sizes = [4, 32], strides = [1, 1]} : vector<4x128xf32> to vector<4x32xf32>
    %257 = math.tanh %256 : vector<4x32xf32>
    %258 = vector.extract_strided_slice %239 {offsets = [0, 96], sizes = [4, 32], strides = [1, 1]} : vector<4x128xf32> to vector<4x32xf32>
    %cst_95 = arith.constant 0.000000e+00 : f32
    %259 = vector.broadcast %cst_95 : f32 to vector<4x32xf32>
    %260 = arith.subf %259, %258 : vector<4x32xf32>
    %261 = math.exp %260 : vector<4x32xf32>
    %cst_96 = arith.constant 1.000000e+00 : f32
    %262 = vector.broadcast %cst_96 : f32 to vector<4x32xf32>
    %263 = arith.addf %262, %261 : vector<4x32xf32>
    %cst_97 = arith.constant 1.000000e+00 : f32
    %264 = vector.broadcast %cst_97 : f32 to vector<4x32xf32>
    %265 = arith.divf %264, %263 : vector<4x32xf32>
    %266 = arith.mulf %255, %230 : vector<4x32xf32>
    %267 = arith.mulf %247, %257 : vector<4x32xf32>
    %268 = arith.addf %266, %267 : vector<4x32xf32>
    %269 = math.tanh %268 : vector<4x32xf32>
    %270 = arith.mulf %265, %269 : vector<4x32xf32>
    %c7 = arith.constant 7 : index
    %c0_98 = arith.constant 0 : index
    %c0_99 = arith.constant 0 : index
    %271 = vector.load %arg1[%c7, %c0_98, %c0_99] : memref<8x4x16xf32, #tpu.memory_space<vmem>>, vector<1x4x16xf32>
    %272 = vector.shape_cast %271 : vector<1x4x16xf32> to vector<4x16xf32>
    %cst_100 = arith.constant dense<0.000000e+00> : vector<4x128xf32>
    %273 = tpu.matmul %272, %0, %cst_100 {dimension_numbers = #tpu.dot_dimension_numbers<[1], [0], [0], [1], [0, 0, 1, 1], [], []>} : vector<4x16xf32>, vector<16x128xf32>, vector<4x128xf32> -> vector<4x128xf32>
    %cst_101 = arith.constant dense<0.000000e+00> : vector<4x128xf32>
    %274 = tpu.matmul %270, %1, %cst_101 {dimension_numbers = #tpu.dot_dimension_numbers<[1], [0], [0], [1], [0, 0, 1, 1], [], []>} : vector<4x32xf32>, vector<32x128xf32>, vector<4x128xf32> -> vector<4x128xf32>
    %275 = arith.addf %273, %274 : vector<4x128xf32>
    %276 = vector.broadcast %2 : vector<1x128xf32> to vector<4x128xf32>
    %277 = arith.addf %275, %276 : vector<4x128xf32>
    %278 = vector.extract_strided_slice %277 {offsets = [0, 0], sizes = [4, 32], strides = [1, 1]} : vector<4x128xf32> to vector<4x32xf32>
    %cst_102 = arith.constant 0.000000e+00 : f32
    %279 = vector.broadcast %cst_102 : f32 to vector<4x32xf32>
    %280 = arith.subf %279, %278 : vector<4x32xf32>
    %281 = math.exp %280 : vector<4x32xf32>
    %cst_103 = arith.constant 1.000000e+00 : f32
    %282 = vector.broadcast %cst_103 : f32 to vector<4x32xf32>
    %283 = arith.addf %282, %281 : vector<4x32xf32>
    %cst_104 = arith.constant 1.000000e+00 : f32
    %284 = vector.broadcast %cst_104 : f32 to vector<4x32xf32>
    %285 = arith.divf %284, %283 : vector<4x32xf32>
    %286 = vector.extract_strided_slice %277 {offsets = [0, 32], sizes = [4, 32], strides = [1, 1]} : vector<4x128xf32> to vector<4x32xf32>
    %cst_105 = arith.constant 0.000000e+00 : f32
    %287 = vector.broadcast %cst_105 : f32 to vector<4x32xf32>
    %288 = arith.subf %287, %286 : vector<4x32xf32>
    %289 = math.exp %288 : vector<4x32xf32>
    %cst_106 = arith.constant 1.000000e+00 : f32
    %290 = vector.broadcast %cst_106 : f32 to vector<4x32xf32>
    %291 = arith.addf %290, %289 : vector<4x32xf32>
    %cst_107 = arith.constant 1.000000e+00 : f32
    %292 = vector.broadcast %cst_107 : f32 to vector<4x32xf32>
    %293 = arith.divf %292, %291 : vector<4x32xf32>
    %294 = vector.extract_strided_slice %277 {offsets = [0, 64], sizes = [4, 32], strides = [1, 1]} : vector<4x128xf32> to vector<4x32xf32>
    %295 = math.tanh %294 : vector<4x32xf32>
    %296 = vector.extract_strided_slice %277 {offsets = [0, 96], sizes = [4, 32], strides = [1, 1]} : vector<4x128xf32> to vector<4x32xf32>
    %cst_108 = arith.constant 0.000000e+00 : f32
    %297 = vector.broadcast %cst_108 : f32 to vector<4x32xf32>
    %298 = arith.subf %297, %296 : vector<4x32xf32>
    %299 = math.exp %298 : vector<4x32xf32>
    %cst_109 = arith.constant 1.000000e+00 : f32
    %300 = vector.broadcast %cst_109 : f32 to vector<4x32xf32>
    %301 = arith.addf %300, %299 : vector<4x32xf32>
    %cst_110 = arith.constant 1.000000e+00 : f32
    %302 = vector.broadcast %cst_110 : f32 to vector<4x32xf32>
    %303 = arith.divf %302, %301 : vector<4x32xf32>
    %304 = arith.mulf %293, %268 : vector<4x32xf32>
    %305 = arith.mulf %285, %295 : vector<4x32xf32>
    %306 = arith.addf %304, %305 : vector<4x32xf32>
    %307 = math.tanh %306 : vector<4x32xf32>
    %308 = arith.mulf %303, %307 : vector<4x32xf32>
    %c0_111 = arith.constant 0 : index
    %c0_112 = arith.constant 0 : index
    %309 = vector.load %arg5[%c0_111, %c0_112] : memref<32x8xf32, #tpu.memory_space<vmem>>, vector<32x8xf32>
    %cst_113 = arith.constant dense<0.000000e+00> : vector<4x8xf32>
    %310 = tpu.matmul %308, %309, %cst_113 {dimension_numbers = #tpu.dot_dimension_numbers<[1], [0], [0], [1], [0, 0, 1, 1], [], []>} : vector<4x32xf32>, vector<32x8xf32>, vector<4x8xf32> -> vector<4x8xf32>
    %c0_114 = arith.constant 0 : index
    %c0_115 = arith.constant 0 : index
    %311 = vector.load %arg6[%c0_114, %c0_115] : memref<1x8xf32, #tpu.memory_space<vmem>>, vector<1x8xf32>
    %312 = vector.broadcast %311 : vector<1x8xf32> to vector<4x8xf32>
    %313 = arith.addf %310, %312 : vector<4x8xf32>
    %c0_116 = arith.constant 0 : index
    %c0_117 = arith.constant 0 : index
    %314 = vector.load %arg7[%c0_116, %c0_117] : memref<4x8xf32, #tpu.memory_space<vmem>>, vector<4x8xf32>
    tpu.vector_store %arg7[%c0_116, %c0_117], %313 {strides = array<i32>} : memref<4x8xf32, #tpu.memory_space<vmem>>, vector<4x8xf32>,
    return
  }
  func.func @transform_0(%arg0: i32) -> (i32, i32, i32) {
    %c0_i32 = arith.constant 0 : i32
    %c0_i32_0 = arith.constant 0 : i32
    %c0_i32_1 = arith.constant 0 : i32
    %c0_i32_2 = arith.constant 0 : i32
    return %c0_i32, %c0_i32_0, %c0_i32_1 : i32, i32, i32
  }
  func.func @transform_1(%arg0: i32) -> (i32, i32) {
    %c0_i32 = arith.constant 0 : i32
    %c0_i32_0 = arith.constant 0 : i32
    %c0_i32_1 = arith.constant 0 : i32
    return %c0_i32, %c0_i32_0 : i32, i32
  }
  func.func @transform_2(%arg0: i32) -> (i32, i32) {
    %c0_i32 = arith.constant 0 : i32
    %c0_i32_0 = arith.constant 0 : i32
    %c0_i32_1 = arith.constant 0 : i32
    return %c0_i32, %c0_i32_0 : i32, i32
  }
  func.func @transform_3(%arg0: i32) -> (i32, i32) {
    %c0_i32 = arith.constant 0 : i32
    %c0_i32_0 = arith.constant 0 : i32
    %c0_i32_1 = arith.constant 0 : i32
    return %c0_i32, %c0_i32_0 : i32, i32
  }
  func.func @transform_4(%arg0: i32) -> (i32, i32) {
    %c0_i32 = arith.constant 0 : i32
    %c0_i32_0 = arith.constant 0 : i32
    %c0_i32_1 = arith.constant 0 : i32
    return %c0_i32, %c0_i32_0 : i32, i32
  }
  func.func @transform_5(%arg0: i32) -> (i32, i32) {
    %c0_i32 = arith.constant 0 : i32
    %c0_i32_0 = arith.constant 0 : i32
    %c0_i32_1 = arith.constant 0 : i32
    return %c0_i32, %c0_i32_0 : i32, i32
  }
  func.func @transform_6(%arg0: i32) -> (i32, i32) {
    %c0_i32 = arith.constant 0 : i32
    %c0_i32_0 = arith.constant 0 : i32
    %c0_i32_1 = arith.constant 0 : i32
    return %c0_i32, %c0_i32_0 : i32, i32
  }
}

</mosaic_0001>

<llo_original>
// kernel: simple_lstm_forward.1
$region0: #{simple_lstm_forward.1}
  #allocation0 [shape = 'u32[]', space=smem, size = 0x4, offset = 0x4, fixed_abs, tag = 'smem constant byte address 0x4 - core index']
  #allocation1 [shape = 'u32[144,128]{1,0:T(1,128)}', space=vmem, size = 0x12000, scoped, tag = 'internal scratch']
  %s0 = inlined_call_operand.vmem [shape: f32[8,4,16], index: 0, kind: input, shape index: {}]
  %s1 = inlined_call_operand.vmem [shape: f32[16,128], index: 1, kind: input, shape index: {}]
  %s2 = inlined_call_operand.hbm [shape: f32[32,128], index: 2, kind: input, shape index: {}]
  %s3 = inlined_call_operand.vmem [shape: f32[1,128], index: 3, kind: input, shape index: {}]
  %s4 = inlined_call_operand.vmem [shape: f32[32,8], index: 4, kind: input, shape index: {}]
  %s5 = inlined_call_operand.vmem [shape: f32[1,8], index: 5, kind: input, shape index: {}]
  %s6 = inlined_call_operand.hbm [shape: f32[4,8], index: 6, kind: output, shape index: {}]
  %s7 = sld [smem:[#allocation0]]
  $region38: #{simple_lstm_forward.1} parent=0
    _
  %s9 = ssub.s32 1, %s7
  %s10 = scalar_select 0, %s9, %s7
  $region1: #{simple_lstm_forward.1} parent=0
    #allocation2 [shape = 'u8[16384]{0}', space=vmem, size = 0x4000, scoped, tag = 'input window, operand 2, single buffered']
    #allocation3 [shape = 's32[1]{0}', space=sflag, size = 0x4, scoped, tag = 'scoped memory for simple_lstm_forward.1']
    #allocation4 [shape = 's32[1]{0}', space=sflag, size = 0x4, scoped, tag = 'scoped memory for simple_lstm_forward.1']
    #allocation5 [shape = 'u8[2048]{0}', space=vmem, size = 0x800, scoped, tag = 'output window, operand 0, single buffered']
    %11 = vsyncpa [#allocation3], 0
    %12 = vsyncpa [#allocation4], 0
    // Predicated region
    $region2: #{simple_lstm_forward.1} parent=1 // pred_check
      _
    $region3: #{simple_lstm_forward.1} parent=1 // pred_check_branch
      %14 = sbr.rel (0) target = $region5
    $region4: #{simple_lstm_forward.1} parent=1 // pred_region
      _
    $region5: #{simple_lstm_forward.1} parent=1 // pred_fallthru
      _
    // Predicated region
    $region6: #{simple_lstm_forward.1} parent=1 // pred_check
      _
    $region7: #{simple_lstm_forward.1} parent=1 // pred_check_branch
      %16 = sbr.rel (0) target = $region9
    $region8: #{simple_lstm_forward.1} parent=1 // pred_region
      _
    $region9: #{simple_lstm_forward.1} parent=1 // pred_fallthru
      _
    // Predicated region
    $region10: #{simple_lstm_forward.1} parent=1 // pred_check
      _
    $region11: #{simple_lstm_forward.1} parent=1 // pred_check_branch
      %18 = sbr.rel (0) target = $region13
    $region12: #{simple_lstm_forward.1} parent=1 // pred_region
      %s20 = ssub.s32 512, 512
      %21 = vsyncadd [#allocation3], %s20
      %s22 = sshll.u32 [#allocation2], 4
      %s23 = int_to_ptr.vmem [resolvable:$true] %s22
      %28 = dma.hbm_to_vmem [thread:$0]  %s2, 512, %s23, [#allocation3], 128, 128, 8
    $region13: #{simple_lstm_forward.1} parent=1 // pred_fallthru
      _
    // Predicated region
    $region14: #{simple_lstm_forward.1} parent=1 // pred_check
      _
    $region15: #{simple_lstm_forward.1} parent=1 // pred_check_branch
      %30 = sbr.rel (0) target = $region17
    $region16: #{simple_lstm_forward.1} parent=1 // pred_region
      _
    $region17: #{simple_lstm_forward.1} parent=1 // pred_fallthru
      _
    // Predicated region
    $region18: #{simple_lstm_forward.1} parent=1 // pred_check
      _
    $region19: #{simple_lstm_forward.1} parent=1 // pred_check_branch
      %32 = sbr.rel (0) target = $region21
    $region20: #{simple_lstm_forward.1} parent=1 // pred_region
      _
    $region21: #{simple_lstm_forward.1} parent=1 // pred_fallthru
      _
    // Predicated region
    $region22: #{simple_lstm_forward.1} parent=1 // pred_check
      _
    $region23: #{simple_lstm_forward.1} parent=1 // pred_check_branch
      %34 = sbr.rel (0) target = $region25
    $region24: #{simple_lstm_forward.1} parent=1 // pred_region
      _
    $region25: #{simple_lstm_forward.1} parent=1 // pred_fallthru
      _
    // Predicated region
    $region26: #{simple_lstm_forward.1} parent=1 // pred_check
      _
    $region27: #{simple_lstm_forward.1} parent=1 // pred_check_branch
      %36 = sbr.rel (0) target = $region29
    $region28: #{simple_lstm_forward.1} parent=1 // pred_region
      %37 = dma.done [#allocation3], 512
    $region29: #{simple_lstm_forward.1} parent=1 // pred_fallthru
      _
    %v38 = vld [vmem:[%s1] sm:$0xff]
    %v39 = vld [vmem:[%s1 + $0x8] sm:$0xff]
    %v40 = vld [vmem:[#allocation2] sm:$0xff]
    %v41 = vld [vmem:[#allocation2 + $0x8] sm:$0xff]
    %v42 = vld [vmem:[#allocation2 + $0x10] sm:$0xff]
    %v43 = vld [vmem:[#allocation2 + $0x18] sm:$0xff]
    %v44 = vld [vmem:[%s3] sm:$0x1]
    %v45 = vld [vmem:[%s0] sm:$0xf]
    %vm46 = vcmask 261120
    %v48 = vsel %vm46, 0.0, 0
    %50 = vmatprep.subr.mxu0 0.0
    %51 = vmatpush1.msra.mxu0 %v40
    %52 = vmatprep.subr.mxu0 0.0
    %53 = vmatpush1.msra.mxu0 %v41
    %54 = vmatprep.subr.mxu0 0.0
    %55 = vmatpush1.msra.mxu0 %v42
    %56 = vmatprep.subr.mxu0 0.0
    %57 = vmatpush1.msra.mxu0 %v43
    %58 = vmatprep.subr.mxu0 0.0
    %59 = vmatpush1.msra.mxu0 0.0
    %60 = vmatprep.subr.mxu0 0.0
    %61 = vmatpush1.msra.mxu0 0.0
    %62 = vmatprep.subr.mxu0 0.0
    %63 = vmatpush1.msra.mxu0 0.0
    %64 = vmatprep.subr.mxu0 0.0
    %65 = vmatpush1.msra.mxu0 0.0
    %66 = vmatprep.subr.mxu0 0.0
    %67 = vmatpush1.msra.mxu0 0.0
    %68 = vmatprep.subr.mxu0 0.0
    %69 = vmatpush1.msra.mxu0 0.0
    %70 = vmatprep.subr.mxu0 0.0
    %71 = vmatpush1.msra.mxu0 0.0
    %72 = vmatprep.subr.mxu0 0.0
    %73 = vmatpush1.msra.mxu0 0.0
    %74 = vmatprep.subr.mxu0 0.0
    %75 = vmatpush1.msra.mxu0 0.0
    %76 = vmatprep.subr.mxu0 0.0
    %77 = vmatpush1.msra.mxu0 0.0
    %78 = vmatprep.subr.mxu0 0.0
    %79 = vmatpush1.msra.mxu0 0.0
    %80 = vmatprep.subr.mxu0 0.0
    %81 = vmatpush1.msra.mxu0 0.0
    %82 = vmatprep.subr.mxu0 0.0
    %83 = vmatpush1.msra.mxu0 0.0
    %84 = vmatprep.subr.mxu0 0.0
    %85 = vmatpush1.msra.mxu0 0.0
    %86 = vmatprep.subr.mxu0 0.0
    %87 = vmatpush1.msra.mxu0 0.0
    %88 = vmatprep.subr.mxu0 0.0
    %89 = vmatpush1.msra.mxu0 0.0
    %90 = vmatprep.subr.mxu0 0.0
    %91 = vmatpush1.msra.mxu0 0.0
    %92 = vmatprep.subr.mxu0 0.0
    %93 = vmatpush1.msra.mxu0 0.0
    %94 = vmatprep.subr.mxu0 0.0
    %95 = vmatpush1.msra.mxu0 0.0
    %96 = vmatprep.subr.mxu0 0.0
    %97 = vmatpush1.msra.mxu0 0.0
    %98 = vmatprep.subr.mxu0 0.0
    %99 = vmatpush1.msra.mxu0 0.0
    %100 = vmatprep.subr.mxu0 0.0
    %101 = vmatpush1.msra.mxu0 0.0
    %102 = vmatprep.subr.mxu0 0.0
    %103 = vmatpush1.msra.mxu0 0.0
    %104 = vmatprep.subr.mxu0 0.0
    %105 = vmatpush1.msra.mxu0 0.0
    %106 = vmatprep.subr.mxu0 0.0
    %107 = vmatpush1.msra.mxu0 0.0
    %108 = vmatprep.subr.mxu0 0.0
    %109 = vmatpush1.msra.mxu0 0.0
    %110 = vmatprep.subr.mxu0 0.0
    %111 = vmatpush1.msra.mxu0 0.0
    %112 = vmatprep.subr.mxu0 0.0
    %113 = vmatpush1.msra.mxu0 0.0
    %114 = vmatprep.mubr.f32.mxu0 0.0
    %115 = vmatmul.mubr.f32.gmra.mrb[0].mxu0 %v48
    %v116 = vpop.f32.mrb[0].mxu0
    %v117 = vadd.f32 0.0, %v116
    %v118 = vpop.f32.mrb[0].mxu0
    %119 = vdwg.mxu0
    %vm120 = vcmask 130048
    %v122 = vsel %vm120, %v45, 0
    %124 = vmatprep.subr.mxu0 0.0
    %125 = vmatpush1.msra.mxu0 %v38
    %126 = vmatprep.subr.mxu0 0.0
    %127 = vmatpush1.msra.mxu0 %v39
    %128 = vmatprep.subr.mxu0 0.0
    %129 = vmatpush1.msra.mxu0 0.0
    %130 = vmatprep.subr.mxu0 0.0
    %131 = vmatpush1.msra.mxu0 0.0
    %132 = vmatprep.subr.mxu0 0.0
    %133 = vmatpush1.msra.mxu0 0.0
    %134 = vmatprep.subr.mxu0 0.0
    %135 = vmatpush1.msra.mxu0 0.0
    %136 = vmatprep.subr.mxu0 0.0
    %137 = vmatpush1.msra.mxu0 0.0
    %138 = vmatprep.subr.mxu0 0.0
    %139 = vmatpush1.msra.mxu0 0.0
    %140 = vmatprep.subr.mxu0 0.0
    %141 = vmatpush1.msra.mxu0 0.0
    %142 = vmatprep.subr.mxu0 0.0
    %143 = vmatpush1.msra.mxu0 0.0
    %144 = vmatprep.subr.mxu0 0.0
    %145 = vmatpush1.msra.mxu0 0.0
    %146 = vmatprep.subr.mxu0 0.0
    %147 = vmatpush1.msra.mxu0 0.0
    %148 = vmatprep.subr.mxu0 0.0
    %149 = vmatpush1.msra.mxu0 0.0
    %150 = vmatprep.subr.mxu0 0.0
    %151 = vmatpush1.msra.mxu0 0.0
    %152 = vmatprep.subr.mxu0 0.0
    %153 = vmatpush1.msra.mxu0 0.0
    %154 = vmatprep.subr.mxu0 0.0
    %155 = vmatpush1.msra.mxu0 0.0
    %156 = vmatprep.subr.mxu0 0.0
    %157 = vmatpush1.msra.mxu0 0.0
    %158 = vmatprep.subr.mxu0 0.0
    %159 = vmatpush1.msra.mxu0 0.0
    %160 = vmatprep.subr.mxu0 0.0
    %161 = vmatpush1.msra.mxu0 0.0
    %162 = vmatprep.subr.mxu0 0.0
    %163 = vmatpush1.msra.mxu0 0.0
    %164 = vmatprep.subr.mxu0 0.0
    %165 = vmatpush1.msra.mxu0 0.0
    %166 = vmatprep.subr.mxu0 0.0
    %167 = vmatpush1.msra.mxu0 0.0
    %168 = vmatprep.subr.mxu0 0.0
    %169 = vmatpush1.msra.mxu0 0.0
    %170 = vmatprep.subr.mxu0 0.0
    %171 = vmatpush1.msra.mxu0 0.0
    %172 = vmatprep.subr.mxu0 0.0
    %173 = vmatpush1.msra.mxu0 0.0
    %174 = vmatprep.subr.mxu0 0.0
    %175 = vmatpush1.msra.mxu0 0.0
    %176 = vmatprep.subr.mxu0 0.0
    %177 = vmatpush1.msra.mxu0 0.0
    %178 = vmatprep.subr.mxu0 0.0
    %179 = vmatpush1.msra.mxu0 0.0
    %180 = vmatprep.subr.mxu0 0.0
    %181 = vmatpush1.msra.mxu0 0.0
    %182 = vmatprep.subr.mxu0 0.0
    %183 = vmatpush1.msra.mxu0 0.0
    %184 = vmatprep.subr.mxu0 0.0
    %185 = vmatpush1.msra.mxu0 0.0
    %186 = vmatprep.subr.mxu0 0.0
    %187 = vmatpush1.msra.mxu0 0.0
    %188 = vmatprep.mubr.f32.mxu0 0.0
    %189 = vmatmul.mubr.f32.gmra.mrb[0].mxu0 %v122
    %v190 = vpop.f32.mrb[0].mxu0
    %v191 = vadd.f32 %v117, %v190
    %v192 = vpop.f32.mrb[0].mxu0
    %193 = vdwg.mxu0
    %v195 = vlaneseq
    %v196 = vshrl.u32 %v195, 7
    %v197 = vsub.s32 0, %v196
    %v198 = vrot.slane %v44, %v197
    %v200 = vadd.f32 %v191, %v198
    %v201 = vsub.f32 0.0, %v200
    %v202 = vmul.f32 %v201, 1.442695
    %v203 = vpow.pop %v202
    %v204 = vadd.f32 %v203, 1.0
    %v205 = vrcp.pop %v204
    %v206 = vmul.f32 1.0, %v205
    %v207 = vtanh.pop %v200
    %v208 = vmul.f32 %v206, 0.0
    %210 = vrot.lane.b32.xlu0 %v207, 64
    %v211 = vpop.permute.xlu0 %210
    %v213 = vmul.f32 %v206, %v211
    %215 = vrot.lane.b32.xlu0 %v213, 32
    %v216 = vpop.permute.xlu0 %215
    %v218 = vadd.f32 %v208, %v216
    %v219 = vtanh.pop %v218
    %221 = vrot.lane.b32.xlu0 %v219, 64
    %v222 = vpop.permute.xlu0 %221
    %v224 = vmul.f32 %v206, %v222
    %s225 = scalar_lea.vmem %s0, 4
    %v226 = vld [vmem:[%s225] sm:$0xf]
    %228 = vrot.lane.b32.xlu0 %v224, 32
    %v229 = vpop.permute.xlu0 %228
    %v230 = vsel %vm46, %v229, 0
    %232 = vmatprep.subr.mxu0 0.0
    %233 = vmatpush1.msra.mxu0 %v40
    %234 = vmatprep.subr.mxu0 0.0
    %235 = vmatpush1.msra.mxu0 %v41
    %236 = vmatprep.subr.mxu0 0.0
    %237 = vmatpush1.msra.mxu0 %v42
    %238 = vmatprep.subr.mxu0 0.0
    %239 = vmatpush1.msra.mxu0 %v43
    %240 = vmatprep.subr.mxu0 0.0
    %241 = vmatpush1.msra.mxu0 0.0
    %242 = vmatprep.subr.mxu0 0.0
    %243 = vmatpush1.msra.mxu0 0.0
    %244 = vmatprep.subr.mxu0 0.0
    %245 = vmatpush1.msra.mxu0 0.0
    %246 = vmatprep.subr.mxu0 0.0
    %247 = vmatpush1.msra.mxu0 0.0
    %248 = vmatprep.subr.mxu0 0.0
    %249 = vmatpush1.msra.mxu0 0.0
    %250 = vmatprep.subr.mxu0 0.0
    %251 = vmatpush1.msra.mxu0 0.0
    %252 = vmatprep.subr.mxu0 0.0
    %253 = vmatpush1.msra.mxu0 0.0
    %254 = vmatprep.subr.mxu0 0.0
    %255 = vmatpush1.msra.mxu0 0.0
    %256 = vmatprep.subr.mxu0 0.0
    %257 = vmatpush1.msra.mxu0 0.0
    %258 = vmatprep.subr.mxu0 0.0
    %259 = vmatpush1.msra.mxu0 0.0
    %260 = vmatprep.subr.mxu0 0.0
    %261 = vmatpush1.msra.mxu0 0.0
    %262 = vmatprep.subr.mxu0 0.0
    %263 = vmatpush1.msra.mxu0 0.0
    %264 = vmatprep.subr.mxu0 0.0
    %265 = vmatpush1.msra.mxu0 0.0
    %266 = vmatprep.subr.mxu0 0.0
    %267 = vmatpush1.msra.mxu0 0.0
    %268 = vmatprep.subr.mxu0 0.0
    %269 = vmatpush1.msra.mxu0 0.0
    %270 = vmatprep.subr.mxu0 0.0
    %271 = vmatpush1.msra.mxu0 0.0
    %272 = vmatprep.subr.mxu0 0.0
    %273 = vmatpush1.msra.mxu0 0.0
    %274 = vmatprep.subr.mxu0 0.0
    %275 = vmatpush1.msra.mxu0 0.0
    %276 = vmatprep.subr.mxu0 0.0
    %277 = vmatpush1.msra.mxu0 0.0
    %278 = vmatprep.subr.mxu0 0.0
    %279 = vmatpush1.msra.mxu0 0.0
    %280 = vmatprep.subr.mxu0 0.0
    %281 = vmatpush1.msra.mxu0 0.0
    %282 = vmatprep.subr.mxu0 0.0
    %283 = vmatpush1.msra.mxu0 0.0
    %284 = vmatprep.subr.mxu0 0.0
    %285 = vmatpush1.msra.mxu0 0.0
    %286 = vmatprep.subr.mxu0 0.0
    %287 = vmatpush1.msra.mxu0 0.0
    %288 = vmatprep.subr.mxu0 0.0
    %289 = vmatpush1.msra.mxu0 0.0
    %290 = vmatprep.subr.mxu0 0.0
    %291 = vmatpush1.msra.mxu0 0.0
    %292 = vmatprep.subr.mxu0 0.0
    %293 = vmatpush1.msra.mxu0 0.0
    %294 = vmatprep.subr.mxu0 0.0
    %295 = vmatpush1.msra.mxu0 0.0
    %296 = vmatprep.mubr.f32.mxu0 0.0
    %297 = vmatmul.mubr.f32.gmra.mrb[0].mxu0 %v230
    %v298 = vpop.f32.mrb[0].mxu0
    %v299 = vadd.f32 0.0, %v298
    %v300 = vpop.f32.mrb[0].mxu0
    %301 = vdwg.mxu0
    %v303 = vsel %vm120, %v226, 0
    %305 = vmatprep.subr.mxu0 0.0
    %306 = vmatpush1.msra.mxu0 %v38
    %307 = vmatprep.subr.mxu0 0.0
    %308 = vmatpush1.msra.mxu0 %v39
    %309 = vmatprep.subr.mxu0 0.0
    %310 = vmatpush1.msra.mxu0 0.0
    %311 = vmatprep.subr.mxu0 0.0
    %312 = vmatpush1.msra.mxu0 0.0
    %313 = vmatprep.subr.mxu0 0.0
    %314 = vmatpush1.msra.mxu0 0.0
    %315 = vmatprep.subr.mxu0 0.0
    %316 = vmatpush1.msra.mxu0 0.0
    %317 = vmatprep.subr.mxu0 0.0
    %318 = vmatpush1.msra.mxu0 0.0
    %319 = vmatprep.subr.mxu0 0.0
    %320 = vmatpush1.msra.mxu0 0.0
    %321 = vmatprep.subr.mxu0 0.0
    %322 = vmatpush1.msra.mxu0 0.0
    %323 = vmatprep.subr.mxu0 0.0
    %324 = vmatpush1.msra.mxu0 0.0
    %325 = vmatprep.subr.mxu0 0.0
    %326 = vmatpush1.msra.mxu0 0.0
    %327 = vmatprep.subr.mxu0 0.0
    %328 = vmatpush1.msra.mxu0 0.0
    %329 = vmatprep.subr.mxu0 0.0
    %330 = vmatpush1.msra.mxu0 0.0
    %331 = vmatprep.subr.mxu0 0.0
    %332 = vmatpush1.msra.mxu0 0.0
    %333 = vmatprep.subr.mxu0 0.0
    %334 = vmatpush1.msra.mxu0 0.0
    %335 = vmatprep.subr.mxu0 0.0
    %336 = vmatpush1.msra.mxu0 0.0
    %337 = vmatprep.subr.mxu0 0.0
    %338 = vmatpush1.msra.mxu0 0.0
    %339 = vmatprep.subr.mxu0 0.0
    %340 = vmatpush1.msra.mxu0 0.0
    %341 = vmatprep.subr.mxu0 0.0
    %342 = vmatpush1.msra.mxu0 0.0
    %343 = vmatprep.subr.mxu0 0.0
    %344 = vmatpush1.msra.mxu0 0.0
    %345 = vmatprep.subr.mxu0 0.0
    %346 = vmatpush1.msra.mxu0 0.0
    %347 = vmatprep.subr.mxu0 0.0
    %348 = vmatpush1.msra.mxu0 0.0
    %349 = vmatprep.subr.mxu0 0.0
    %350 = vmatpush1.msra.mxu0 0.0
    %351 = vmatprep.subr.mxu0 0.0
    %352 = vmatpush1.msra.mxu0 0.0
    %353 = vmatprep.subr.mxu0 0.0
    %354 = vmatpush1.msra.mxu0 0.0
    %355 = vmatprep.subr.mxu0 0.0
    %356 = vmatpush1.msra.mxu0 0.0
    %357 = vmatprep.subr.mxu0 0.0
    %358 = vmatpush1.msra.mxu0 0.0
    %359 = vmatprep.subr.mxu0 0.0
    %360 = vmatpush1.msra.mxu0 0.0
    %361 = vmatprep.subr.mxu0 0.0
    %362 = vmatpush1.msra.mxu0 0.0
    %363 = vmatprep.subr.mxu0 0.0
    %364 = vmatpush1.msra.mxu0 0.0
    %365 = vmatprep.subr.mxu0 0.0
    %366 = vmatpush1.msra.mxu0 0.0
    %367 = vmatprep.subr.mxu0 0.0
    %368 = vmatpush1.msra.mxu0 0.0
    %369 = vmatprep.mubr.f32.mxu0 0.0
    %370 = vmatmul.mubr.f32.gmra.mrb[0].mxu0 %v303
    %v371 = vpop.f32.mrb[0].mxu0
    %v372 = vadd.f32 %v299, %v371
    %v373 = vpop.f32.mrb[0].mxu0
    %374 = vdwg.mxu0
    %v375 = vadd.f32 %v372, %v198
    %v376 = vsub.f32 0.0, %v375
    %v377 = vmul.f32 %v376, 1.442695
    %v378 = vpow.pop %v377
    %v379 = vadd.f32 %v378, 1.0
    %v380 = vrcp.pop %v379
    %v381 = vmul.f32 1.0, %v380
    %v382 = vtanh.pop %v375
    %v383 = vmul.f32 %v381, %v218
    %385 = vrot.lane.b32.xlu0 %v382, 64
    %v386 = vpop.permute.xlu0 %385
    %v388 = vmul.f32 %v381, %v386
    %390 = vrot.lane.b32.xlu0 %v388, 32
    %v391 = vpop.permute.xlu0 %390
    %v393 = vadd.f32 %v383, %v391
    %v394 = vtanh.pop %v393
    %396 = vrot.lane.b32.xlu0 %v394, 64
    %v397 = vpop.permute.xlu0 %396
    %v399 = vmul.f32 %v381, %v397
    %s400 = scalar_lea.vmem %s0, 8
    %v401 = vld [vmem:[%s400] sm:$0xf]
    %403 = vrot.lane.b32.xlu0 %v399, 32
    %v404 = vpop.permute.xlu0 %403
    %v405 = vsel %vm46, %v404, 0
    %407 = vmatprep.subr.mxu0 0.0
    %408 = vmatpush1.msra.mxu0 %v40
    %409 = vmatprep.subr.mxu0 0.0
    %410 = vmatpush1.msra.mxu0 %v41
    %411 = vmatprep.subr.mxu0 0.0
    %412 = vmatpush1.msra.mxu0 %v42
    %413 = vmatprep.subr.mxu0 0.0
    %414 = vmatpush1.msra.mxu0 %v43
    %415 = vmatprep.subr.mxu0 0.0
    %416 = vmatpush1.msra.mxu0 0.0
    %417 = vmatprep.subr.mxu0 0.0
    %418 = vmatpush1.msra.mxu0 0.0
    %419 = vmatprep.subr.mxu0 0.0
    %420 = vmatpush1.msra.mxu0 0.0
    %421 = vmatprep.subr.mxu0 0.0
    %422 = vmatpush1.msra.mxu0 0.0
    %423 = vmatprep.subr.mxu0 0.0
    %424 = vmatpush1.msra.mxu0 0.0
    %425 = vmatprep.subr.mxu0 0.0
    %426 = vmatpush1.msra.mxu0 0.0
    %427 = vmatprep.subr.mxu0 0.0
    %428 = vmatpush1.msra.mxu0 0.0
    %429 = vmatprep.subr.mxu0 0.0
    %430 = vmatpush1.msra.mxu0 0.0
    %431 = vmatprep.subr.mxu0 0.0
    %432 = vmatpush1.msra.mxu0 0.0
    %433 = vmatprep.subr.mxu0 0.0
    %434 = vmatpush1.msra.mxu0 0.0
    %435 = vmatprep.subr.mxu0 0.0
    %436 = vmatpush1.msra.mxu0 0.0
    %437 = vmatprep.subr.mxu0 0.0
    %438 = vmatpush1.msra.mxu0 0.0
    %439 = vmatprep.subr.mxu0 0.0
    %440 = vmatpush1.msra.mxu0 0.0
    %441 = vmatprep.subr.mxu0 0.0
    %442 = vmatpush1.msra.mxu0 0.0
    %443 = vmatprep.subr.mxu0 0.0
    %444 = vmatpush1.msra.mxu0 0.0
    %445 = vmatprep.subr.mxu0 0.0
    %446 = vmatpush1.msra.mxu0 0.0
    %447 = vmatprep.subr.mxu0 0.0
    %448 = vmatpush1.msra.mxu0 0.0
    %449 = vmatprep.subr.mxu0 0.0
    %450 = vmatpush1.msra.mxu0 0.0
    %451 = vmatprep.subr.mxu0 0.0
    %452 = vmatpush1.msra.mxu0 0.0
    %453 = vmatprep.subr.mxu0 0.0
    %454 = vmatpush1.msra.mxu0 0.0
    %455 = vmatprep.subr.mxu0 0.0
    %456 = vmatpush1.msra.mxu0 0.0
    %457 = vmatprep.subr.mxu0 0.0
    %458 = vmatpush1.msra.mxu0 0.0
    %459 = vmatprep.subr.mxu0 0.0
    %460 = vmatpush1.msra.mxu0 0.0
    %461 = vmatprep.subr.mxu0 0.0
    %462 = vmatpush1.msra.mxu0 0.0
    %463 = vmatprep.subr.mxu0 0.0
    %464 = vmatpush1.msra.mxu0 0.0
    %465 = vmatprep.subr.mxu0 0.0
    %466 = vmatpush1.msra.mxu0 0.0
    %467 = vmatprep.subr.mxu0 0.0
    %468 = vmatpush1.msra.mxu0 0.0
    %469 = vmatprep.subr.mxu0 0.0
    %470 = vmatpush1.msra.mxu0 0.0
    %471 = vmatprep.mubr.f32.mxu0 0.0
    %472 = vmatmul.mubr.f32.gmra.mrb[0].mxu0 %v405
    %v473 = vpop.f32.mrb[0].mxu0
    %v474 = vadd.f32 0.0, %v473
    %v475 = vpop.f32.mrb[0].mxu0
    %476 = vdwg.mxu0
    %v478 = vsel %vm120, %v401, 0
    %480 = vmatprep.subr.mxu0 0.0
    %481 = vmatpush1.msra.mxu0 %v38
    %482 = vmatprep.subr.mxu0 0.0
    %483 = vmatpush1.msra.mxu0 %v39
    %484 = vmatprep.subr.mxu0 0.0
    %485 = vmatpush1.msra.mxu0 0.0
    %486 = vmatprep.subr.mxu0 0.0
    %487 = vmatpush1.msra.mxu0 0.0
    %488 = vmatprep.subr.mxu0 0.0
    %489 = vmatpush1.msra.mxu0 0.0
    %490 = vmatprep.subr.mxu0 0.0
    %491 = vmatpush1.msra.mxu0 0.0
    %492 = vmatprep.subr.mxu0 0.0
    %493 = vmatpush1.msra.mxu0 0.0
    %494 = vmatprep.subr.mxu0 0.0
    %495 = vmatpush1.msra.mxu0 0.0
    %496 = vmatprep.subr.mxu0 0.0
    %497 = vmatpush1.msra.mxu0 0.0
    %498 = vmatprep.subr.mxu0 0.0
    %499 = vmatpush1.msra.mxu0 0.0
    %500 = vmatprep.subr.mxu0 0.0
    %501 = vmatpush1.msra.mxu0 0.0
    %502 = vmatprep.subr.mxu0 0.0
    %503 = vmatpush1.msra.mxu0 0.0
    %504 = vmatprep.subr.mxu0 0.0
    %505 = vmatpush1.msra.mxu0 0.0
    %506 = vmatprep.subr.mxu0 0.0
    %507 = vmatpush1.msra.mxu0 0.0
    %508 = vmatprep.subr.mxu0 0.0
    %509 = vmatpush1.msra.mxu0 0.0
    %510 = vmatprep.subr.mxu0 0.0
    %511 = vmatpush1.msra.mxu0 0.0
    %512 = vmatprep.subr.mxu0 0.0
    %513 = vmatpush1.msra.mxu0 0.0
    %514 = vmatprep.subr.mxu0 0.0
    %515 = vmatpush1.msra.mxu0 0.0
    %516 = vmatprep.subr.mxu0 0.0
    %517 = vmatpush1.msra.mxu0 0.0
    %518 = vmatprep.subr.mxu0 0.0
    %519 = vmatpush1.msra.mxu0 0.0
    %520 = vmatprep.subr.mxu0 0.0
    %521 = vmatpush1.msra.mxu0 0.0
    %522 = vmatprep.subr.mxu0 0.0
    %523 = vmatpush1.msra.mxu0 0.0
    %524 = vmatprep.subr.mxu0 0.0
    %525 = vmatpush1.msra.mxu0 0.0
    %526 = vmatprep.subr.mxu0 0.0
    %527 = vmatpush1.msra.mxu0 0.0
    %528 = vmatprep.subr.mxu0 0.0
    %529 = vmatpush1.msra.mxu0 0.0
    %530 = vmatprep.subr.mxu0 0.0
    %531 = vmatpush1.msra.mxu0 0.0
    %532 = vmatprep.subr.mxu0 0.0
    %533 = vmatpush1.msra.mxu0 0.0
    %534 = vmatprep.subr.mxu0 0.0
    %535 = vmatpush1.msra.mxu0 0.0
    %536 = vmatprep.subr.mxu0 0.0
    %537 = vmatpush1.msra.mxu0 0.0
    %538 = vmatprep.subr.mxu0 0.0
    %539 = vmatpush1.msra.mxu0 0.0
    %540 = vmatprep.subr.mxu0 0.0
    %541 = vmatpush1.msra.mxu0 0.0
    %542 = vmatprep.subr.mxu0 0.0
    %543 = vmatpush1.msra.mxu0 0.0
    %544 = vmatprep.mubr.f32.mxu0 0.0
    %545 = vmatmul.mubr.f32.gmra.mrb[0].mxu0 %v478
    %v546 = vpop.f32.mrb[0].mxu0
    %v547 = vadd.f32 %v474, %v546
    %v548 = vpop.f32.mrb[0].mxu0
    %549 = vdwg.mxu0
    %v550 = vadd.f32 %v547, %v198
    %v551 = vsub.f32 0.0, %v550
    %v552 = vmul.f32 %v551, 1.442695
    %v553 = vpow.pop %v552
    %v554 = vadd.f32 %v553, 1.0
    %v555 = vrcp.pop %v554
    %v556 = vmul.f32 1.0, %v555
    %v557 = vtanh.pop %v550
    %v558 = vmul.f32 %v556, %v393
    %560 = vrot.lane.b32.xlu0 %v557, 64
    %v561 = vpop.permute.xlu0 %560
    %v563 = vmul.f32 %v556, %v561
    %565 = vrot.lane.b32.xlu0 %v563, 32
    %v566 = vpop.permute.xlu0 %565
    %v568 = vadd.f32 %v558, %v566
    %v569 = vtanh.pop %v568
    %571 = vrot.lane.b32.xlu0 %v569, 64
    %v572 = vpop.permute.xlu0 %571
    %v574 = vmul.f32 %v556, %v572
    %s575 = scalar_lea.vmem %s0, 12
    %v576 = vld [vmem:[%s575] sm:$0xf]
    %578 = vrot.lane.b32.xlu0 %v574, 32
    %v579 = vpop.permute.xlu0 %578
    %v580 = vsel %vm46, %v579, 0
    %582 = vmatprep.subr.mxu0 0.0
    %583 = vmatpush1.msra.mxu0 %v40
    %584 = vmatprep.subr.mxu0 0.0
    %585 = vmatpush1.msra.mxu0 %v41
    %586 = vmatprep.subr.mxu0 0.0
    %587 = vmatpush1.msra.mxu0 %v42
    %588 = vmatprep.subr.mxu0 0.0
    %589 = vmatpush1.msra.mxu0 %v43
    %590 = vmatprep.subr.mxu0 0.0
    %591 = vmatpush1.msra.mxu0 0.0
    %592 = vmatprep.subr.mxu0 0.0
    %593 = vmatpush1.msra.mxu0 0.0
    %594 = vmatprep.subr.mxu0 0.0
    %595 = vmatpush1.msra.mxu0 0.0
    %596 = vmatprep.subr.mxu0 0.0
    %597 = vmatpush1.msra.mxu0 0.0
    %598 = vmatprep.subr.mxu0 0.0
    %599 = vmatpush1.msra.mxu0 0.0
    %600 = vmatprep.subr.mxu0 0.0
    %601 = vmatpush1.msra.mxu0 0.0
    %602 = vmatprep.subr.mxu0 0.0
    %603 = vmatpush1.msra.mxu0 0.0
    %604 = vmatprep.subr.mxu0 0.0
    %605 = vmatpush1.msra.mxu0 0.0
    %606 = vmatprep.subr.mxu0 0.0
    %607 = vmatpush1.msra.mxu0 0.0
    %608 = vmatprep.subr.mxu0 0.0
    %609 = vmatpush1.msra.mxu0 0.0
    %610 = vmatprep.subr.mxu0 0.0
    %611 = vmatpush1.msra.mxu0 0.0
    %612 = vmatprep.subr.mxu0 0.0
    %613 = vmatpush1.msra.mxu0 0.0
    %614 = vmatprep.subr.mxu0 0.0
    %615 = vmatpush1.msra.mxu0 0.0
    %616 = vmatprep.subr.mxu0 0.0
    %617 = vmatpush1.msra.mxu0 0.0
    %618 = vmatprep.subr.mxu0 0.0
    %619 = vmatpush1.msra.mxu0 0.0
    %620 = vmatprep.subr.mxu0 0.0
    %621 = vmatpush1.msra.mxu0 0.0
    %622 = vmatprep.subr.mxu0 0.0
    %623 = vmatpush1.msra.mxu0 0.0
    %624 = vmatprep.subr.mxu0 0.0
    %625 = vmatpush1.msra.mxu0 0.0
    %626 = vmatprep.subr.mxu0 0.0
    %627 = vmatpush1.msra.mxu0 0.0
    %628 = vmatprep.subr.mxu0 0.0
    %629 = vmatpush1.msra.mxu0 0.0
    %630 = vmatprep.subr.mxu0 0.0
    %631 = vmatpush1.msra.mxu0 0.0
    %632 = vmatprep.subr.mxu0 0.0
    %633 = vmatpush1.msra.mxu0 0.0
    %634 = vmatprep.subr.mxu0 0.0
    %635 = vmatpush1.msra.mxu0 0.0
    %636 = vmatprep.subr.mxu0 0.0
    %637 = vmatpush1.msra.mxu0 0.0
    %638 = vmatprep.subr.mxu0 0.0
    %639 = vmatpush1.msra.mxu0 0.0
    %640 = vmatprep.subr.mxu0 0.0
    %641 = vmatpush1.msra.mxu0 0.0
    %642 = vmatprep.subr.mxu0 0.0
    %643 = vmatpush1.msra.mxu0 0.0
    %644 = vmatprep.subr.mxu0 0.0
    %645 = vmatpush1.msra.mxu0 0.0
    %646 = vmatprep.mubr.f32.mxu0 0.0
    %647 = vmatmul.mubr.f32.gmra.mrb[0].mxu0 %v580
    %v648 = vpop.f32.mrb[0].mxu0
    %v649 = vadd.f32 0.0, %v648
    %v650 = vpop.f32.mrb[0].mxu0
    %651 = vdwg.mxu0
    %v653 = vsel %vm120, %v576, 0
    %655 = vmatprep.subr.mxu0 0.0
    %656 = vmatpush1.msra.mxu0 %v38
    %657 = vmatprep.subr.mxu0 0.0
    %658 = vmatpush1.msra.mxu0 %v39
    %659 = vmatprep.subr.mxu0 0.0
    %660 = vmatpush1.msra.mxu0 0.0
    %661 = vmatprep.subr.mxu0 0.0
    %662 = vmatpush1.msra.mxu0 0.0
    %663 = vmatprep.subr.mxu0 0.0
    %664 = vmatpush1.msra.mxu0 0.0
    %665 = vmatprep.subr.mxu0 0.0
    %666 = vmatpush1.msra.mxu0 0.0
    %667 = vmatprep.subr.mxu0 0.0
    %668 = vmatpush1.msra.mxu0 0.0
    %669 = vmatprep.subr.mxu0 0.0
    %670 = vmatpush1.msra.mxu0 0.0
    %671 = vmatprep.subr.mxu0 0.0
    %672 = vmatpush1.msra.mxu0 0.0
    %673 = vmatprep.subr.mxu0 0.0
    %674 = vmatpush1.msra.mxu0 0.0
    %675 = vmatprep.subr.mxu0 0.0
    %676 = vmatpush1.msra.mxu0 0.0
    %677 = vmatprep.subr.mxu0 0.0
    %678 = vmatpush1.msra.mxu0 0.0
    %679 = vmatprep.subr.mxu0 0.0
    %680 = vmatpush1.msra.mxu0 0.0
    %681 = vmatprep.subr.mxu0 0.0
    %682 = vmatpush1.msra.mxu0 0.0
    %683 = vmatprep.subr.mxu0 0.0
    %684 = vmatpush1.msra.mxu0 0.0
    %685 = vmatprep.subr.mxu0 0.0
    %686 = vmatpush1.msra.mxu0 0.0
    %687 = vmatprep.subr.mxu0 0.0
    %688 = vmatpush1.msra.mxu0 0.0
    %689 = vmatprep.subr.mxu0 0.0
    %690 = vmatpush1.msra.mxu0 0.0
    %691 = vmatprep.subr.mxu0 0.0
    %692 = vmatpush1.msra.mxu0 0.0
    %693 = vmatprep.subr.mxu0 0.0
    %694 = vmatpush1.msra.mxu0 0.0
    %695 = vmatprep.subr.mxu0 0.0
    %696 = vmatpush1.msra.mxu0 0.0
    %697 = vmatprep.subr.mxu0 0.0
    %698 = vmatpush1.msra.mxu0 0.0
    %699 = vmatprep.subr.mxu0 0.0
    %700 = vmatpush1.msra.mxu0 0.0
    %701 = vmatprep.subr.mxu0 0.0
    %702 = vmatpush1.msra.mxu0 0.0
    %703 = vmatprep.subr.mxu0 0.0
    %704 = vmatpush1.msra.mxu0 0.0
    %705 = vmatprep.subr.mxu0 0.0
    %706 = vmatpush1.msra.mxu0 0.0
    %707 = vmatprep.subr.mxu0 0.0
    %708 = vmatpush1.msra.mxu0 0.0
    %709 = vmatprep.subr.mxu0 0.0
    %710 = vmatpush1.msra.mxu0 0.0
    %711 = vmatprep.subr.mxu0 0.0
    %712 = vmatpush1.msra.mxu0 0.0
    %713 = vmatprep.subr.mxu0 0.0
    %714 = vmatpush1.msra.mxu0 0.0
    %715 = vmatprep.subr.mxu0 0.0
    %716 = vmatpush1.msra.mxu0 0.0
    %717 = vmatprep.subr.mxu0 0.0
    %718 = vmatpush1.msra.mxu0 0.0
    %719 = vmatprep.mubr.f32.mxu0 0.0
    %720 = vmatmul.mubr.f32.gmra.mrb[0].mxu0 %v653
    %v721 = vpop.f32.mrb[0].mxu0
    %v722 = vadd.f32 %v649, %v721
    %v723 = vpop.f32.mrb[0].mxu0
    %724 = vdwg.mxu0
    %v725 = vadd.f32 %v722, %v198
    %v726 = vsub.f32 0.0, %v725
    %v727 = vmul.f32 %v726, 1.442695
    %v728 = vpow.pop %v727
    %v729 = vadd.f32 %v728, 1.0
    %v730 = vrcp.pop %v729
    %v731 = vmul.f32 1.0, %v730
    %v732 = vtanh.pop %v725
    %v733 = vmul.f32 %v731, %v568
    %735 = vrot.lane.b32.xlu0 %v732, 64
    %v736 = vpop.permute.xlu0 %735
    %v738 = vmul.f32 %v731, %v736
    %740 = vrot.lane.b32.xlu0 %v738, 32
    %v741 = vpop.permute.xlu0 %740
    %v743 = vadd.f32 %v733, %v741
    %v744 = vtanh.pop %v743
    %746 = vrot.lane.b32.xlu0 %v744, 64
    %v747 = vpop.permute.xlu0 %746
    %v749 = vmul.f32 %v731, %v747
    %s750 = scalar_lea.vmem %s0, 16
    %v751 = vld [vmem:[%s750] sm:$0xf]
    %753 = vrot.lane.b32.xlu0 %v749, 32
    %v754 = vpop.permute.xlu0 %753
    %v755 = vsel %vm46, %v754, 0
    %757 = vmatprep.subr.mxu0 0.0
    %758 = vmatpush1.msra.mxu0 %v40
    %759 = vmatprep.subr.mxu0 0.0
    %760 = vmatpush1.msra.mxu0 %v41
    %761 = vmatprep.subr.mxu0 0.0
    %762 = vmatpush1.msra.mxu0 %v42
    %763 = vmatprep.subr.mxu0 0.0
    %764 = vmatpush1.msra.mxu0 %v43
    %765 = vmatprep.subr.mxu0 0.0
    %766 = vmatpush1.msra.mxu0 0.0
    %767 = vmatprep.subr.mxu0 0.0
    %768 = vmatpush1.msra.mxu0 0.0
    %769 = vmatprep.subr.mxu0 0.0
    %770 = vmatpush1.msra.mxu0 0.0
    %771 = vmatprep.subr.mxu0 0.0
    %772 = vmatpush1.msra.mxu0 0.0
    %773 = vmatprep.subr.mxu0 0.0
    %774 = vmatpush1.msra.mxu0 0.0
    %775 = vmatprep.subr.mxu0 0.0
    %776 = vmatpush1.msra.mxu0 0.0
    %777 = vmatprep.subr.mxu0 0.0
    %778 = vmatpush1.msra.mxu0 0.0
    %779 = vmatprep.subr.mxu0 0.0
    %780 = vmatpush1.msra.mxu0 0.0
    %781 = vmatprep.subr.mxu0 0.0
    %782 = vmatpush1.msra.mxu0 0.0
    %783 = vmatprep.subr.mxu0 0.0
    %784 = vmatpush1.msra.mxu0 0.0
    %785 = vmatprep.subr.mxu0 0.0
    %786 = vmatpush1.msra.mxu0 0.0
    %787 = vmatprep.subr.mxu0 0.0
    %788 = vmatpush1.msra.mxu0 0.0
    %789 = vmatprep.subr.mxu0 0.0
    %790 = vmatpush1.msra.mxu0 0.0
    %791 = vmatprep.subr.mxu0 0.0
    %792 = vmatpush1.msra.mxu0 0.0
    %793 = vmatprep.subr.mxu0 0.0
    %794 = vmatpush1.msra.mxu0 0.0
    %795 = vmatprep.subr.mxu0 0.0
    %796 = vmatpush1.msra.mxu0 0.0
    %797 = vmatprep.subr.mxu0 0.0
    %798 = vmatpush1.msra.mxu0 0.0
    %799 = vmatprep.subr.mxu0 0.0
    %800 = vmatpush1.msra.mxu0 0.0
    %801 = vmatprep.subr.mxu0 0.0
    %802 = vmatpush1.msra.mxu0 0.0
    %803 = vmatprep.subr.mxu0 0.0
    %804 = vmatpush1.msra.mxu0 0.0
    %805 = vmatprep.subr.mxu0 0.0
    %806 = vmatpush1.msra.mxu0 0.0
    %807 = vmatprep.subr.mxu0 0.0
    %808 = vmatpush1.msra.mxu0 0.0
    %809 = vmatprep.subr.mxu0 0.0
    %810 = vmatpush1.msra.mxu0 0.0
    %811 = vmatprep.subr.mxu0 0.0
    %812 = vmatpush1.msra.mxu0 0.0
    %813 = vmatprep.subr.mxu0 0.0
    %814 = vmatpush1.msra.mxu0 0.0
    %815 = vmatprep.subr.mxu0 0.0
    %816 = vmatpush1.msra.mxu0 0.0
    %817 = vmatprep.subr.mxu0 0.0
    %818 = vmatpush1.msra.mxu0 0.0
    %819 = vmatprep.subr.mxu0 0.0
    %820 = vmatpush1.msra.mxu0 0.0
    %821 = vmatprep.mubr.f32.mxu0 0.0
    %822 = vmatmul.mubr.f32.gmra.mrb[0].mxu0 %v755
    %v823 = vpop.f32.mrb[0].mxu0
    %v824 = vadd.f32 0.0, %v823
    %v825 = vpop.f32.mrb[0].mxu0
    %826 = vdwg.mxu0
    %v828 = vsel %vm120, %v751, 0
    %830 = vmatprep.subr.mxu0 0.0
    %831 = vmatpush1.msra.mxu0 %v38
    %832 = vmatprep.subr.mxu0 0.0
    %833 = vmatpush1.msra.mxu0 %v39
    %834 = vmatprep.subr.mxu0 0.0
    %835 = vmatpush1.msra.mxu0 0.0
    %836 = vmatprep.subr.mxu0 0.0
    %837 = vmatpush1.msra.mxu0 0.0
    %838 = vmatprep.subr.mxu0 0.0
    %839 = vmatpush1.msra.mxu0 0.0
    %840 = vmatprep.subr.mxu0 0.0
    %841 = vmatpush1.msra.mxu0 0.0
    %842 = vmatprep.subr.mxu0 0.0
    %843 = vmatpush1.msra.mxu0 0.0
    %844 = vmatprep.subr.mxu0 0.0
    %845 = vmatpush1.msra.mxu0 0.0
    %846 = vmatprep.subr.mxu0 0.0
    %847 = vmatpush1.msra.mxu0 0.0
    %848 = vmatprep.subr.mxu0 0.0
    %849 = vmatpush1.msra.mxu0 0.0
    %850 = vmatprep.subr.mxu0 0.0
    %851 = vmatpush1.msra.mxu0 0.0
    %852 = vmatprep.subr.mxu0 0.0
    %853 = vmatpush1.msra.mxu0 0.0
    %854 = vmatprep.subr.mxu0 0.0
    %855 = vmatpush1.msra.mxu0 0.0
    %856 = vmatprep.subr.mxu0 0.0
    %857 = vmatpush1.msra.mxu0 0.0
    %858 = vmatprep.subr.mxu0 0.0
    %859 = vmatpush1.msra.mxu0 0.0
    %860 = vmatprep.subr.mxu0 0.0
    %861 = vmatpush1.msra.mxu0 0.0
    %862 = vmatprep.subr.mxu0 0.0
    %863 = vmatpush1.msra.mxu0 0.0
    %864 = vmatprep.subr.mxu0 0.0
    %865 = vmatpush1.msra.mxu0 0.0
    %866 = vmatprep.subr.mxu0 0.0
    %867 = vmatpush1.msra.mxu0 0.0
    %868 = vmatprep.subr.mxu0 0.0
    %869 = vmatpush1.msra.mxu0 0.0
    %870 = vmatprep.subr.mxu0 0.0
    %871 = vmatpush1.msra.mxu0 0.0
    %872 = vmatprep.subr.mxu0 0.0
    %873 = vmatpush1.msra.mxu0 0.0
    %874 = vmatprep.subr.mxu0 0.0
    %875 = vmatpush1.msra.mxu0 0.0
    %876 = vmatprep.subr.mxu0 0.0
    %877 = vmatpush1.msra.mxu0 0.0
    %878 = vmatprep.subr.mxu0 0.0
    %879 = vmatpush1.msra.mxu0 0.0
    %880 = vmatprep.subr.mxu0 0.0
    %881 = vmatpush1.msra.mxu0 0.0
    %882 = vmatprep.subr.mxu0 0.0
    %883 = vmatpush1.msra.mxu0 0.0
    %884 = vmatprep.subr.mxu0 0.0
    %885 = vmatpush1.msra.mxu0 0.0
    %886 = vmatprep.subr.mxu0 0.0
    %887 = vmatpush1.msra.mxu0 0.0
    %888 = vmatprep.subr.mxu0 0.0
    %889 = vmatpush1.msra.mxu0 0.0
    %890 = vmatprep.subr.mxu0 0.0
    %891 = vmatpush1.msra.mxu0 0.0
    %892 = vmatprep.subr.mxu0 0.0
    %893 = vmatpush1.msra.mxu0 0.0
    %894 = vmatprep.mubr.f32.mxu0 0.0
    %895 = vmatmul.mubr.f32.gmra.mrb[0].mxu0 %v828
    %v896 = vpop.f32.mrb[0].mxu0
    %v897 = vadd.f32 %v824, %v896
    %v898 = vpop.f32.mrb[0].mxu0
    %899 = vdwg.mxu0
    %v900 = vadd.f32 %v897, %v198
    %v901 = vsub.f32 0.0, %v900
    %v902 = vmul.f32 %v901, 1.442695
    %v903 = vpow.pop %v902
    %v904 = vadd.f32 %v903, 1.0
    %v905 = vrcp.pop %v904
    %v906 = vmul.f32 1.0, %v905
    %v907 = vtanh.pop %v900
    %v908 = vmul.f32 %v906, %v743
    %910 = vrot.lane.b32.xlu0 %v907, 64
    %v911 = vpop.permute.xlu0 %910
    %v913 = vmul.f32 %v906, %v911
    %915 = vrot.lane.b32.xlu0 %v913, 32
    %v916 = vpop.permute.xlu0 %915
    %v918 = vadd.f32 %v908, %v916
    %v919 = vtanh.pop %v918
    %921 = vrot.lane.b32.xlu0 %v919, 64
    %v922 = vpop.permute.xlu0 %921
    %v924 = vmul.f32 %v906, %v922
    %s925 = scalar_lea.vmem %s0, 20
    %v926 = vld [vmem:[%s925] sm:$0xf]
    %928 = vrot.lane.b32.xlu0 %v924, 32
    %v929 = vpop.permute.xlu0 %928
    %v930 = vsel %vm46, %v929, 0
    %932 = vmatprep.subr.mxu0 0.0
    %933 = vmatpush1.msra.mxu0 %v40
    %934 = vmatprep.subr.mxu0 0.0
    %935 = vmatpush1.msra.mxu0 %v41
    %936 = vmatprep.subr.mxu0 0.0
    %937 = vmatpush1.msra.mxu0 %v42
    %938 = vmatprep.subr.mxu0 0.0
    %939 = vmatpush1.msra.mxu0 %v43
    %940 = vmatprep.subr.mxu0 0.0
    %941 = vmatpush1.msra.mxu0 0.0
    %942 = vmatprep.subr.mxu0 0.0
    %943 = vmatpush1.msra.mxu0 0.0
    %944 = vmatprep.subr.mxu0 0.0
    %945 = vmatpush1.msra.mxu0 0.0
    %946 = vmatprep.subr.mxu0 0.0
    %947 = vmatpush1.msra.mxu0 0.0
    %948 = vmatprep.subr.mxu0 0.0
    %949 = vmatpush1.msra.mxu0 0.0
    %950 = vmatprep.subr.mxu0 0.0
    %951 = vmatpush1.msra.mxu0 0.0
    %952 = vmatprep.subr.mxu0 0.0
    %953 = vmatpush1.msra.mxu0 0.0
    %954 = vmatprep.subr.mxu0 0.0
    %955 = vmatpush1.msra.mxu0 0.0
    %956 = vmatprep.subr.mxu0 0.0
    %957 = vmatpush1.msra.mxu0 0.0
    %958 = vmatprep.subr.mxu0 0.0
    %959 = vmatpush1.msra.mxu0 0.0
    %960 = vmatprep.subr.mxu0 0.0
    %961 = vmatpush1.msra.mxu0 0.0
    %962 = vmatprep.subr.mxu0 0.0
    %963 = vmatpush1.msra.mxu0 0.0
    %964 = vmatprep.subr.mxu0 0.0
    %965 = vmatpush1.msra.mxu0 0.0
    %966 = vmatprep.subr.mxu0 0.0
    %967 = vmatpush1.msra.mxu0 0.0
    %968 = vmatprep.subr.mxu0 0.0
    %969 = vmatpush1.msra.mxu0 0.0
    %970 = vmatprep.subr.mxu0 0.0
    %971 = vmatpush1.msra.mxu0 0.0
    %972 = vmatprep.subr.mxu0 0.0
    %973 = vmatpush1.msra.mxu0 0.0
    %974 = vmatprep.subr.mxu0 0.0
    %975 = vmatpush1.msra.mxu0 0.0
    %976 = vmatprep.subr.mxu0 0.0
    %977 = vmatpush1.msra.mxu0 0.0
    %978 = vmatprep.subr.mxu0 0.0
    %979 = vmatpush1.msra.mxu0 0.0
    %980 = vmatprep.subr.mxu0 0.0
    %981 = vmatpush1.msra.mxu0 0.0
    %982 = vmatprep.subr.mxu0 0.0
    %983 = vmatpush1.msra.mxu0 0.0
    %984 = vmatprep.subr.mxu0 0.0
    %985 = vmatpush1.msra.mxu0 0.0
    %986 = vmatprep.subr.mxu0 0.0
    %987 = vmatpush1.msra.mxu0 0.0
    %988 = vmatprep.subr.mxu0 0.0
    %989 = vmatpush1.msra.mxu0 0.0
    %990 = vmatprep.subr.mxu0 0.0
    %991 = vmatpush1.msra.mxu0 0.0
    %992 = vmatprep.subr.mxu0 0.0
    %993 = vmatpush1.msra.mxu0 0.0
    %994 = vmatprep.subr.mxu0 0.0
    %995 = vmatpush1.msra.mxu0 0.0
    %996 = vmatprep.mubr.f32.mxu0 0.0
    %997 = vmatmul.mubr.f32.gmra.mrb[0].mxu0 %v930
    %v998 = vpop.f32.mrb[0].mxu0
    %v999 = vadd.f32 0.0, %v998
    %v1000 = vpop.f32.mrb[0].mxu0
    %1001 = vdwg.mxu0
    %v1003 = vsel %vm120, %v926, 0
    %1005 = vmatprep.subr.mxu0 0.0
    %1006 = vmatpush1.msra.mxu0 %v38
    %1007 = vmatprep.subr.mxu0 0.0
    %1008 = vmatpush1.msra.mxu0 %v39
    %1009 = vmatprep.subr.mxu0 0.0
    %1010 = vmatpush1.msra.mxu0 0.0
    %1011 = vmatprep.subr.mxu0 0.0
    %1012 = vmatpush1.msra.mxu0 0.0
    %1013 = vmatprep.subr.mxu0 0.0
    %1014 = vmatpush1.msra.mxu0 0.0
    %1015 = vmatprep.subr.mxu0 0.0
    %1016 = vmatpush1.msra.mxu0 0.0
    %1017 = vmatprep.subr.mxu0 0.0
    %1018 = vmatpush1.msra.mxu0 0.0
    %1019 = vmatprep.subr.mxu0 0.0
    %1020 = vmatpush1.msra.mxu0 0.0
    %1021 = vmatprep.subr.mxu0 0.0
    %1022 = vmatpush1.msra.mxu0 0.0
    %1023 = vmatprep.subr.mxu0 0.0
    %1024 = vmatpush1.msra.mxu0 0.0
    %1025 = vmatprep.subr.mxu0 0.0
    %1026 = vmatpush1.msra.mxu0 0.0
    %1027 = vmatprep.subr.mxu0 0.0
    %1028 = vmatpush1.msra.mxu0 0.0
    %1029 = vmatprep.subr.mxu0 0.0
    %1030 = vmatpush1.msra.mxu0 0.0
    %1031 = vmatprep.subr.mxu0 0.0
    %1032 = vmatpush1.msra.mxu0 0.0
    %1033 = vmatprep.subr.mxu0 0.0
    %1034 = vmatpush1.msra.mxu0 0.0
    %1035 = vmatprep.subr.mxu0 0.0
    %1036 = vmatpush1.msra.mxu0 0.0
    %1037 = vmatprep.subr.mxu0 0.0
    %1038 = vmatpush1.msra.mxu0 0.0
    %1039 = vmatprep.subr.mxu0 0.0
    %1040 = vmatpush1.msra.mxu0 0.0
    %1041 = vmatprep.subr.mxu0 0.0
    %1042 = vmatpush1.msra.mxu0 0.0
    %1043 = vmatprep.subr.mxu0 0.0
    %1044 = vmatpush1.msra.mxu0 0.0
    %1045 = vmatprep.subr.mxu0 0.0
    %1046 = vmatpush1.msra.mxu0 0.0
    %1047 = vmatprep.subr.mxu0 0.0
    %1048 = vmatpush1.msra.mxu0 0.0
    %1049 = vmatprep.subr.mxu0 0.0
    %1050 = vmatpush1.msra.mxu0 0.0
    %1051 = vmatprep.subr.mxu0 0.0
    %1052 = vmatpush1.msra.mxu0 0.0
    %1053 = vmatprep.subr.mxu0 0.0
    %1054 = vmatpush1.msra.mxu0 0.0
    %1055 = vmatprep.subr.mxu0 0.0
    %1056 = vmatpush1.msra.mxu0 0.0
    %1057 = vmatprep.subr.mxu0 0.0
    %1058 = vmatpush1.msra.mxu0 0.0
    %1059 = vmatprep.subr.mxu0 0.0
    %1060 = vmatpush1.msra.mxu0 0.0
    %1061 = vmatprep.subr.mxu0 0.0
    %1062 = vmatpush1.msra.mxu0 0.0
    %1063 = vmatprep.subr.mxu0 0.0
    %1064 = vmatpush1.msra.mxu0 0.0
    %1065 = vmatprep.subr.mxu0 0.0
    %1066 = vmatpush1.msra.mxu0 0.0
    %1067 = vmatprep.subr.mxu0 0.0
    %1068 = vmatpush1.msra.mxu0 0.0
    %1069 = vmatprep.mubr.f32.mxu0 0.0
    %1070 = vmatmul.mubr.f32.gmra.mrb[0].mxu0 %v1003
    %v1071 = vpop.f32.mrb[0].mxu0
    %v1072 = vadd.f32 %v999, %v1071
    %v1073 = vpop.f32.mrb[0].mxu0
    %1074 = vdwg.mxu0
    %v1075 = vadd.f32 %v1072, %v198
    %v1076 = vsub.f32 0.0, %v1075
    %v1077 = vmul.f32 %v1076, 1.442695
    %v1078 = vpow.pop %v1077
    %v1079 = vadd.f32 %v1078, 1.0
    %v1080 = vrcp.pop %v1079
    %v1081 = vmul.f32 1.0, %v1080
    %v1082 = vtanh.pop %v1075
    %v1083 = vmul.f32 %v1081, %v918
    %1085 = vrot.lane.b32.xlu0 %v1082, 64
    %v1086 = vpop.permute.xlu0 %1085
    %v1088 = vmul.f32 %v1081, %v1086
    %1090 = vrot.lane.b32.xlu0 %v1088, 32
    %v1091 = vpop.permute.xlu0 %1090
    %v1093 = vadd.f32 %v1083, %v1091
    %v1094 = vtanh.pop %v1093
    %1096 = vrot.lane.b32.xlu0 %v1094, 64
    %v1097 = vpop.permute.xlu0 %1096
    %v1099 = vmul.f32 %v1081, %v1097
    %s1100 = scalar_lea.vmem %s0, 24
    %v1101 = vld [vmem:[%s1100] sm:$0xf]
    %1103 = vrot.lane.b32.xlu0 %v1099, 32
    %v1104 = vpop.permute.xlu0 %1103
    %v1105 = vsel %vm46, %v1104, 0
    %1107 = vmatprep.subr.mxu0 0.0
    %1108 = vmatpush1.msra.mxu0 %v40
    %1109 = vmatprep.subr.mxu0 0.0
    %1110 = vmatpush1.msra.mxu0 %v41
    %1111 = vmatprep.subr.mxu0 0.0
    %1112 = vmatpush1.msra.mxu0 %v42
    %1113 = vmatprep.subr.mxu0 0.0
    %1114 = vmatpush1.msra.mxu0 %v43
    %1115 = vmatprep.subr.mxu0 0.0
    %1116 = vmatpush1.msra.mxu0 0.0
    %1117 = vmatprep.subr.mxu0 0.0
    %1118 = vmatpush1.msra.mxu0 0.0
    %1119 = vmatprep.subr.mxu0 0.0
    %1120 = vmatpush1.msra.mxu0 0.0
    %1121 = vmatprep.subr.mxu0 0.0
    %1122 = vmatpush1.msra.mxu0 0.0
    %1123 = vmatprep.subr.mxu0 0.0
    %1124 = vmatpush1.msra.mxu0 0.0
    %1125 = vmatprep.subr.mxu0 0.0
    %1126 = vmatpush1.msra.mxu0 0.0
    %1127 = vmatprep.subr.mxu0 0.0
    %1128 = vmatpush1.msra.mxu0 0.0
    %1129 = vmatprep.subr.mxu0 0.0
    %1130 = vmatpush1.msra.mxu0 0.0
    %1131 = vmatprep.subr.mxu0 0.0
    %1132 = vmatpush1.msra.mxu0 0.0
    %1133 = vmatprep.subr.mxu0 0.0
    %1134 = vmatpush1.msra.mxu0 0.0
    %1135 = vmatprep.subr.mxu0 0.0
    %1136 = vmatpush1.msra.mxu0 0.0
    %1137 = vmatprep.subr.mxu0 0.0
    %1138 = vmatpush1.msra.mxu0 0.0
    %1139 = vmatprep.subr.mxu0 0.0
    %1140 = vmatpush1.msra.mxu0 0.0
    %1141 = vmatprep.subr.mxu0 0.0
    %1142 = vmatpush1.msra.mxu0 0.0
    %1143 = vmatprep.subr.mxu0 0.0
    %1144 = vmatpush1.msra.mxu0 0.0
    %1145 = vmatprep.subr.mxu0 0.0
    %1146 = vmatpush1.msra.mxu0 0.0
    %1147 = vmatprep.subr.mxu0 0.0
    %1148 = vmatpush1.msra.mxu0 0.0
    %1149 = vmatprep.subr.mxu0 0.0
    %1150 = vmatpush1.msra.mxu0 0.0
    %1151 = vmatprep.subr.mxu0 0.0
    %1152 = vmatpush1.msra.mxu0 0.0
    %1153 = vmatprep.subr.mxu0 0.0
    %1154 = vmatpush1.msra.mxu0 0.0
    %1155 = vmatprep.subr.mxu0 0.0
    %1156 = vmatpush1.msra.mxu0 0.0
    %1157 = vmatprep.subr.mxu0 0.0
    %1158 = vmatpush1.msra.mxu0 0.0
    %1159 = vmatprep.subr.mxu0 0.0
    %1160 = vmatpush1.msra.mxu0 0.0
    %1161 = vmatprep.subr.mxu0 0.0
    %1162 = vmatpush1.msra.mxu0 0.0
    %1163 = vmatprep.subr.mxu0 0.0
    %1164 = vmatpush1.msra.mxu0 0.0
    %1165 = vmatprep.subr.mxu0 0.0
    %1166 = vmatpush1.msra.mxu0 0.0
    %1167 = vmatprep.subr.mxu0 0.0
    %1168 = vmatpush1.msra.mxu0 0.0
    %1169 = vmatprep.subr.mxu0 0.0
    %1170 = vmatpush1.msra.mxu0 0.0
    %1171 = vmatprep.mubr.f32.mxu0 0.0
    %1172 = vmatmul.mubr.f32.gmra.mrb[0].mxu0 %v1105
    %v1173 = vpop.f32.mrb[0].mxu0
    %v1174 = vadd.f32 0.0, %v1173
    %v1175 = vpop.f32.mrb[0].mxu0
    %1176 = vdwg.mxu0
    %v1178 = vsel %vm120, %v1101, 0
    %1180 = vmatprep.subr.mxu0 0.0
    %1181 = vmatpush1.msra.mxu0 %v38
    %1182 = vmatprep.subr.mxu0 0.0
    %1183 = vmatpush1.msra.mxu0 %v39
    %1184 = vmatprep.subr.mxu0 0.0
    %1185 = vmatpush1.msra.mxu0 0.0
    %1186 = vmatprep.subr.mxu0 0.0
    %1187 = vmatpush1.msra.mxu0 0.0
    %1188 = vmatprep.subr.mxu0 0.0
    %1189 = vmatpush1.msra.mxu0 0.0
    %1190 = vmatprep.subr.mxu0 0.0
    %1191 = vmatpush1.msra.mxu0 0.0
    %1192 = vmatprep.subr.mxu0 0.0
    %1193 = vmatpush1.msra.mxu0 0.0
    %1194 = vmatprep.subr.mxu0 0.0
    %1195 = vmatpush1.msra.mxu0 0.0
    %1196 = vmatprep.subr.mxu0 0.0
    %1197 = vmatpush1.msra.mxu0 0.0
    %1198 = vmatprep.subr.mxu0 0.0
    %1199 = vmatpush1.msra.mxu0 0.0
    %1200 = vmatprep.subr.mxu0 0.0
    %1201 = vmatpush1.msra.mxu0 0.0
    %1202 = vmatprep.subr.mxu0 0.0
    %1203 = vmatpush1.msra.mxu0 0.0
    %1204 = vmatprep.subr.mxu0 0.0
    %1205 = vmatpush1.msra.mxu0 0.0
    %1206 = vmatprep.subr.mxu0 0.0
    %1207 = vmatpush1.msra.mxu0 0.0
    %1208 = vmatprep.subr.mxu0 0.0
    %1209 = vmatpush1.msra.mxu0 0.0
    %1210 = vmatprep.subr.mxu0 0.0
    %1211 = vmatpush1.msra.mxu0 0.0
    %1212 = vmatprep.subr.mxu0 0.0
    %1213 = vmatpush1.msra.mxu0 0.0
    %1214 = vmatprep.subr.mxu0 0.0
    %1215 = vmatpush1.msra.mxu0 0.0
    %1216 = vmatprep.subr.mxu0 0.0
    %1217 = vmatpush1.msra.mxu0 0.0
    %1218 = vmatprep.subr.mxu0 0.0
    %1219 = vmatpush1.msra.mxu0 0.0
    %1220 = vmatprep.subr.mxu0 0.0
    %1221 = vmatpush1.msra.mxu0 0.0
    %1222 = vmatprep.subr.mxu0 0.0
    %1223 = vmatpush1.msra.mxu0 0.0
    %1224 = vmatprep.subr.mxu0 0.0
    %1225 = vmatpush1.msra.mxu0 0.0
    %1226 = vmatprep.subr.mxu0 0.0
    %1227 = vmatpush1.msra.mxu0 0.0
    %1228 = vmatprep.subr.mxu0 0.0
    %1229 = vmatpush1.msra.mxu0 0.0
    %1230 = vmatprep.subr.mxu0 0.0
    %1231 = vmatpush1.msra.mxu0 0.0
    %1232 = vmatprep.subr.mxu0 0.0
    %1233 = vmatpush1.msra.mxu0 0.0
    %1234 = vmatprep.subr.mxu0 0.0
    %1235 = vmatpush1.msra.mxu0 0.0
    %1236 = vmatprep.subr.mxu0 0.0
    %1237 = vmatpush1.msra.mxu0 0.0
    %1238 = vmatprep.subr.mxu0 0.0
    %1239 = vmatpush1.msra.mxu0 0.0
    %1240 = vmatprep.subr.mxu0 0.0
    %1241 = vmatpush1.msra.mxu0 0.0
    %1242 = vmatprep.subr.mxu0 0.0
    %1243 = vmatpush1.msra.mxu0 0.0
    %1244 = vmatprep.mubr.f32.mxu0 0.0
    %1245 = vmatmul.mubr.f32.gmra.mrb[0].mxu0 %v1178
    %v1246 = vpop.f32.mrb[0].mxu0
    %v1247 = vadd.f32 %v1174, %v1246
    %v1248 = vpop.f32.mrb[0].mxu0
    %1249 = vdwg.mxu0
    %v1250 = vadd.f32 %v1247, %v198
    %v1251 = vsub.f32 0.0, %v1250
    %v1252 = vmul.f32 %v1251, 1.442695
    %v1253 = vpow.pop %v1252
    %v1254 = vadd.f32 %v1253, 1.0
    %v1255 = vrcp.pop %v1254
    %v1256 = vmul.f32 1.0, %v1255
    %v1257 = vtanh.pop %v1250
    %v1258 = vmul.f32 %v1256, %v1093
    %1260 = vrot.lane.b32.xlu0 %v1257, 64
    %v1261 = vpop.permute.xlu0 %1260
    %v1263 = vmul.f32 %v1256, %v1261
    %1265 = vrot.lane.b32.xlu0 %v1263, 32
    %v1266 = vpop.permute.xlu0 %1265
    %v1268 = vadd.f32 %v1258, %v1266
    %v1269 = vtanh.pop %v1268
    %1271 = vrot.lane.b32.xlu0 %v1269, 64
    %v1272 = vpop.permute.xlu0 %1271
    %v1274 = vmul.f32 %v1256, %v1272
    %s1275 = scalar_lea.vmem %s0, 28
    %v1276 = vld [vmem:[%s1275] sm:$0xf]
    %1278 = vrot.lane.b32.xlu0 %v1274, 32
    %v1279 = vpop.permute.xlu0 %1278
    %v1280 = vsel %vm46, %v1279, 0
    %1282 = vmatprep.subr.mxu0 0.0
    %1283 = vmatpush1.msra.mxu0 %v40
    %1284 = vmatprep.subr.mxu0 0.0
    %1285 = vmatpush1.msra.mxu0 %v41
    %1286 = vmatprep.subr.mxu0 0.0
    %1287 = vmatpush1.msra.mxu0 %v42
    %1288 = vmatprep.subr.mxu0 0.0
    %1289 = vmatpush1.msra.mxu0 %v43
    %1290 = vmatprep.subr.mxu0 0.0
    %1291 = vmatpush1.msra.mxu0 0.0
    %1292 = vmatprep.subr.mxu0 0.0
    %1293 = vmatpush1.msra.mxu0 0.0
    %1294 = vmatprep.subr.mxu0 0.0
    %1295 = vmatpush1.msra.mxu0 0.0
    %1296 = vmatprep.subr.mxu0 0.0
    %1297 = vmatpush1.msra.mxu0 0.0
    %1298 = vmatprep.subr.mxu0 0.0
    %1299 = vmatpush1.msra.mxu0 0.0
    %1300 = vmatprep.subr.mxu0 0.0
    %1301 = vmatpush1.msra.mxu0 0.0
    %1302 = vmatprep.subr.mxu0 0.0
    %1303 = vmatpush1.msra.mxu0 0.0
    %1304 = vmatprep.subr.mxu0 0.0
    %1305 = vmatpush1.msra.mxu0 0.0
    %1306 = vmatprep.subr.mxu0 0.0
    %1307 = vmatpush1.msra.mxu0 0.0
    %1308 = vmatprep.subr.mxu0 0.0
    %1309 = vmatpush1.msra.mxu0 0.0
    %1310 = vmatprep.subr.mxu0 0.0
    %1311 = vmatpush1.msra.mxu0 0.0
    %1312 = vmatprep.subr.mxu0 0.0
    %1313 = vmatpush1.msra.mxu0 0.0
    %1314 = vmatprep.subr.mxu0 0.0
    %1315 = vmatpush1.msra.mxu0 0.0
    %1316 = vmatprep.subr.mxu0 0.0
    %1317 = vmatpush1.msra.mxu0 0.0
    %1318 = vmatprep.subr.mxu0 0.0
    %1319 = vmatpush1.msra.mxu0 0.0
    %1320 = vmatprep.subr.mxu0 0.0
    %1321 = vmatpush1.msra.mxu0 0.0
    %1322 = vmatprep.subr.mxu0 0.0
    %1323 = vmatpush1.msra.mxu0 0.0
    %1324 = vmatprep.subr.mxu0 0.0
    %1325 = vmatpush1.msra.mxu0 0.0
    %1326 = vmatprep.subr.mxu0 0.0
    %1327 = vmatpush1.msra.mxu0 0.0
    %1328 = vmatprep.subr.mxu0 0.0
    %1329 = vmatpush1.msra.mxu0 0.0
    %1330 = vmatprep.subr.mxu0 0.0
    %1331 = vmatpush1.msra.mxu0 0.0
    %1332 = vmatprep.subr.mxu0 0.0
    %1333 = vmatpush1.msra.mxu0 0.0
    %1334 = vmatprep.subr.mxu0 0.0
    %1335 = vmatpush1.msra.mxu0 0.0
    %1336 = vmatprep.subr.mxu0 0.0
    %1337 = vmatpush1.msra.mxu0 0.0
    %1338 = vmatprep.subr.mxu0 0.0
    %1339 = vmatpush1.msra.mxu0 0.0
    %1340 = vmatprep.subr.mxu0 0.0
    %1341 = vmatpush1.msra.mxu0 0.0
    %1342 = vmatprep.subr.mxu0 0.0
    %1343 = vmatpush1.msra.mxu0 0.0
    %1344 = vmatprep.subr.mxu0 0.0
    %1345 = vmatpush1.msra.mxu0 0.0
    %1346 = vmatprep.mubr.f32.mxu0 0.0
    %1347 = vmatmul.mubr.f32.gmra.mrb[0].mxu0 %v1280
    %v1348 = vpop.f32.mrb[0].mxu0
    %v1349 = vadd.f32 0.0, %v1348
    %v1350 = vpop.f32.mrb[0].mxu0
    %1351 = vdwg.mxu0
    %v1353 = vsel %vm120, %v1276, 0
    %1355 = vmatprep.subr.mxu0 0.0
    %1356 = vmatpush1.msra.mxu0 %v38
    %1357 = vmatprep.subr.mxu0 0.0
    %1358 = vmatpush1.msra.mxu0 %v39
    %1359 = vmatprep.subr.mxu0 0.0
    %1360 = vmatpush1.msra.mxu0 0.0
    %1361 = vmatprep.subr.mxu0 0.0
    %1362 = vmatpush1.msra.mxu0 0.0
    %1363 = vmatprep.subr.mxu0 0.0
    %1364 = vmatpush1.msra.mxu0 0.0
    %1365 = vmatprep.subr.mxu0 0.0
    %1366 = vmatpush1.msra.mxu0 0.0
    %1367 = vmatprep.subr.mxu0 0.0
    %1368 = vmatpush1.msra.mxu0 0.0
    %1369 = vmatprep.subr.mxu0 0.0
    %1370 = vmatpush1.msra.mxu0 0.0
    %1371 = vmatprep.subr.mxu0 0.0
    %1372 = vmatpush1.msra.mxu0 0.0
    %1373 = vmatprep.subr.mxu0 0.0
    %1374 = vmatpush1.msra.mxu0 0.0
    %1375 = vmatprep.subr.mxu0 0.0
    %1376 = vmatpush1.msra.mxu0 0.0
    %1377 = vmatprep.subr.mxu0 0.0
    %1378 = vmatpush1.msra.mxu0 0.0
    %1379 = vmatprep.subr.mxu0 0.0
    %1380 = vmatpush1.msra.mxu0 0.0
    %1381 = vmatprep.subr.mxu0 0.0
    %1382 = vmatpush1.msra.mxu0 0.0
    %1383 = vmatprep.subr.mxu0 0.0
    %1384 = vmatpush1.msra.mxu0 0.0
    %1385 = vmatprep.subr.mxu0 0.0
    %1386 = vmatpush1.msra.mxu0 0.0
    %1387 = vmatprep.subr.mxu0 0.0
    %1388 = vmatpush1.msra.mxu0 0.0
    %1389 = vmatprep.subr.mxu0 0.0
    %1390 = vmatpush1.msra.mxu0 0.0
    %1391 = vmatprep.subr.mxu0 0.0
    %1392 = vmatpush1.msra.mxu0 0.0
    %1393 = vmatprep.subr.mxu0 0.0
    %1394 = vmatpush1.msra.mxu0 0.0
    %1395 = vmatprep.subr.mxu0 0.0
    %1396 = vmatpush1.msra.mxu0 0.0
    %1397 = vmatprep.subr.mxu0 0.0
    %1398 = vmatpush1.msra.mxu0 0.0
    %1399 = vmatprep.subr.mxu0 0.0
    %1400 = vmatpush1.msra.mxu0 0.0
    %1401 = vmatprep.subr.mxu0 0.0
    %1402 = vmatpush1.msra.mxu0 0.0
    %1403 = vmatprep.subr.mxu0 0.0
    %1404 = vmatpush1.msra.mxu0 0.0
    %1405 = vmatprep.subr.mxu0 0.0
    %1406 = vmatpush1.msra.mxu0 0.0
    %1407 = vmatprep.subr.mxu0 0.0
    %1408 = vmatpush1.msra.mxu0 0.0
    %1409 = vmatprep.subr.mxu0 0.0
    %1410 = vmatpush1.msra.mxu0 0.0
    %1411 = vmatprep.subr.mxu0 0.0
    %1412 = vmatpush1.msra.mxu0 0.0
    %1413 = vmatprep.subr.mxu0 0.0
    %1414 = vmatpush1.msra.mxu0 0.0
    %1415 = vmatprep.subr.mxu0 0.0
    %1416 = vmatpush1.msra.mxu0 0.0
    %1417 = vmatprep.subr.mxu0 0.0
    %1418 = vmatpush1.msra.mxu0 0.0
    %1419 = vmatprep.mubr.f32.mxu0 0.0
    %1420 = vmatmul.mubr.f32.gmra.mrb[0].mxu0 %v1353
    %v1421 = vpop.f32.mrb[0].mxu0
    %v1422 = vadd.f32 %v1349, %v1421
    %v1423 = vpop.f32.mrb[0].mxu0
    %1424 = vdwg.mxu0
    %v1425 = vadd.f32 %v1422, %v198
    %v1426 = vsub.f32 0.0, %v1425
    %v1427 = vmul.f32 %v1426, 1.442695
    %v1428 = vpow.pop %v1427
    %v1429 = vadd.f32 %v1428, 1.0
    %v1430 = vrcp.pop %v1429
    %v1431 = vmul.f32 1.0, %v1430
    %v1432 = vtanh.pop %v1425
    %v1433 = vmul.f32 %v1431, %v1268
    %1435 = vrot.lane.b32.xlu0 %v1432, 64
    %v1436 = vpop.permute.xlu0 %1435
    %v1438 = vmul.f32 %v1431, %v1436
    %1440 = vrot.lane.b32.xlu0 %v1438, 32
    %v1441 = vpop.permute.xlu0 %1440
    %v1443 = vadd.f32 %v1433, %v1441
    %v1444 = vtanh.pop %v1443
    %1446 = vrot.lane.b32.xlu0 %v1444, 64
    %v1447 = vpop.permute.xlu0 %1446
    %v1449 = vmul.f32 %v1431, %v1447
    %v1450 = vld [vmem:[%s4] sm:$0xff]
    %v1451 = vld [vmem:[%s4 + $0x8] sm:$0xff]
    %v1452 = vld [vmem:[%s4 + $0x10] sm:$0xff]
    %v1453 = vld [vmem:[%s4 + $0x18] sm:$0xff]
    %v1454 = vld [vmem:[%s5] sm:$0x1]
    %v1456 = vlaneseq
    %v1457 = vshrl.u32 %v1456, 7
    %v1458 = vsub.s32 0, %v1457
    %v1459 = vrot.slane %v1454, %v1458
    %1462 = vrot.lane.b32.xlu0 %v1449, 32
    %v1463 = vpop.permute.xlu0 %1462
    %v1464 = vsel %vm46, %v1463, 0
    %1466 = vmatprep.subr.mxu0 0.0
    %1467 = vmatpush1.msra.mxu0 %v1450
    %1468 = vmatprep.subr.mxu0 0.0
    %1469 = vmatpush1.msra.mxu0 %v1451
    %1470 = vmatprep.subr.mxu0 0.0
    %1471 = vmatpush1.msra.mxu0 %v1452
    %1472 = vmatprep.subr.mxu0 0.0
    %1473 = vmatpush1.msra.mxu0 %v1453
    %1474 = vmatprep.subr.mxu0 0.0
    %1475 = vmatpush1.msra.mxu0 0.0
    %1476 = vmatprep.subr.mxu0 0.0
    %1477 = vmatpush1.msra.mxu0 0.0
    %1478 = vmatprep.subr.mxu0 0.0
    %1479 = vmatpush1.msra.mxu0 0.0
    %1480 = vmatprep.subr.mxu0 0.0
    %1481 = vmatpush1.msra.mxu0 0.0
    %1482 = vmatprep.subr.mxu0 0.0
    %1483 = vmatpush1.msra.mxu0 0.0
    %1484 = vmatprep.subr.mxu0 0.0
    %1485 = vmatpush1.msra.mxu0 0.0
    %1486 = vmatprep.subr.mxu0 0.0
    %1487 = vmatpush1.msra.mxu0 0.0
    %1488 = vmatprep.subr.mxu0 0.0
    %1489 = vmatpush1.msra.mxu0 0.0
    %1490 = vmatprep.subr.mxu0 0.0
    %1491 = vmatpush1.msra.mxu0 0.0
    %1492 = vmatprep.subr.mxu0 0.0
    %1493 = vmatpush1.msra.mxu0 0.0
    %1494 = vmatprep.subr.mxu0 0.0
    %1495 = vmatpush1.msra.mxu0 0.0
    %1496 = vmatprep.subr.mxu0 0.0
    %1497 = vmatpush1.msra.mxu0 0.0
    %1498 = vmatprep.subr.mxu0 0.0
    %1499 = vmatpush1.msra.mxu0 0.0
    %1500 = vmatprep.subr.mxu0 0.0
    %1501 = vmatpush1.msra.mxu0 0.0
    %1502 = vmatprep.subr.mxu0 0.0
    %1503 = vmatpush1.msra.mxu0 0.0
    %1504 = vmatprep.subr.mxu0 0.0
    %1505 = vmatpush1.msra.mxu0 0.0
    %1506 = vmatprep.subr.mxu0 0.0
    %1507 = vmatpush1.msra.mxu0 0.0
    %1508 = vmatprep.subr.mxu0 0.0
    %1509 = vmatpush1.msra.mxu0 0.0
    %1510 = vmatprep.subr.mxu0 0.0
    %1511 = vmatpush1.msra.mxu0 0.0
    %1512 = vmatprep.subr.mxu0 0.0
    %1513 = vmatpush1.msra.mxu0 0.0
    %1514 = vmatprep.subr.mxu0 0.0
    %1515 = vmatpush1.msra.mxu0 0.0
    %1516 = vmatprep.subr.mxu0 0.0
    %1517 = vmatpush1.msra.mxu0 0.0
    %1518 = vmatprep.subr.mxu0 0.0
    %1519 = vmatpush1.msra.mxu0 0.0
    %1520 = vmatprep.subr.mxu0 0.0
    %1521 = vmatpush1.msra.mxu0 0.0
    %1522 = vmatprep.subr.mxu0 0.0
    %1523 = vmatpush1.msra.mxu0 0.0
    %1524 = vmatprep.subr.mxu0 0.0
    %1525 = vmatpush1.msra.mxu0 0.0
    %1526 = vmatprep.subr.mxu0 0.0
    %1527 = vmatpush1.msra.mxu0 0.0
    %1528 = vmatprep.subr.mxu0 0.0
    %1529 = vmatpush1.msra.mxu0 0.0
    %1530 = vmatprep.mubr.f32.mxu0 0.0
    %1531 = vmatmul.mubr.f32.gmra.mrb[0].mxu0 %v1464
    %v1532 = vpop.f32.mrb[0].mxu0
    %v1533 = vadd.f32 %v1459, %v1532
    %v1534 = vpop.f32.mrb[0].mxu0
    %1535 = vdwg.mxu0
    %vm1536 = vcmask 60416
    %1537 = vst.msk [vmem:[#allocation5] sm:$0xf] %vm1536, %v1533
    // Predicated region
    $region30: #{simple_lstm_forward.1} parent=1 // pred_check
      _
    $region31: #{simple_lstm_forward.1} parent=1 // pred_check_branch
      %1539 = sbr.rel (0) target = $region33
    $region32: #{simple_lstm_forward.1} parent=1 // pred_region
      %s1541 = ssub.s32 64, 64
      %1542 = vsyncadd [#allocation4], %s1541
      %s1544 = sshll.u32 [#allocation5], 4
      %s1545 = int_to_ptr.vmem [resolvable:$true] %s1544
      %1547 = dma.vmem_to_hbm [thread:$0]  %s1545, 64, %s6, [#allocation4]
    $region33: #{simple_lstm_forward.1} parent=1 // pred_fallthru
      _
    // Predicated region
    $region34: #{simple_lstm_forward.1} parent=1 // pred_check
      _
    $region35: #{simple_lstm_forward.1} parent=1 // pred_check_branch
      %1549 = sbr.rel (0) target = $region37
    $region36: #{simple_lstm_forward.1} parent=1 // pred_region
      %1550 = dma.done [#allocation4], 64
    $region37: #{simple_lstm_forward.1} parent=1 // pred_fallthru
      _
    %1551 = vsyncpa [#allocation3], 1
    %1552 = vsyncpa [#allocation4], 1

</llo_original>
